<compile_context>
chip_gen: v6e
topology: v6e:2x2x1
jax: 0.10.0
libtpu: 0.0.40
codegen_flags: <defaults>
</compile_context>

<pallas_src>
import functools
import math

import jax
import jax.numpy as jnp
from jax.experimental import pallas as pl
from jax.experimental.pallas import tpu as pltpu  # noqa: F401  (TPU backend)


# ----------------------------- config (small) ------------------------------ #
VOCAB_SIZE = 256
BLOCK_SIZE = 64          # max sequence length (positional table size)
N_LAYER = 2
N_HEAD = 2
N_EMBD = 32              # C
HEAD_DIM = N_EMBD // N_HEAD
LN_EPS = 1e-5            # PyTorch nn.LayerNorm default
MATMUL_DTYPE = jnp.bfloat16   # MXU operand dtype (accumulation stays f32)
NEG_INF = -1e30          # finite causal-mask constant (avoids inf-inf -> NaN)


# --------------------------- in-kernel helpers ------------------------------ #
def _layernorm(x, g, b):
    mean = jnp.mean(x, axis=-1, keepdims=True)
    var = jnp.mean(jnp.square(x - mean), axis=-1, keepdims=True)
    return (x - mean) * jax.lax.rsqrt(var + LN_EPS) * g + b


def _mm(a, b):
    """a @ b on the MXU with bf16 operands, f32 accumulation."""
    return jax.lax.dot_general(
        a.astype(MATMUL_DTYPE), b.astype(MATMUL_DTYPE),
        dimension_numbers=(((1,), (0,)), ((), ())),
        preferred_element_type=jnp.float32)


def _mm_t(a, b):
    """a @ b.T without materializing the transpose (MXU-native)."""
    return jax.lax.dot_general(
        a.astype(MATMUL_DTYPE), b.astype(MATMUL_DTYPE),
        dimension_numbers=(((1,), (1,)), ((), ())),
        preferred_element_type=jnp.float32)


def _gelu_tanh(x):
    c = math.sqrt(2.0 / math.pi)
    return 0.5 * x * (1.0 + jnp.tanh(c * (x + 0.044715 * x * x * x)))


# ---------------------- fused transformer-block kernel ---------------------- #
def _block_kernel(x_ref,
                  ln1_g_ref, ln1_b_ref,
                  wqkv_ref, bqkv_ref,
                  wproj_ref, bproj_ref,
                  ln2_g_ref, ln2_b_ref,
                  wfc_ref, bfc_ref,
                  wmlp_ref, bmlp_ref,
                  o_ref,
                  *, batch, seq, n_head, head_dim):
    c = n_head * head_dim
    scale = 1.0 / math.sqrt(head_dim)

    x = x_ref[...].astype(jnp.float32)                      # (B*T, C) slab

    # ---- attention sub-block (all heads, fully VMEM-resident) ----
    h = _layernorm(x, ln1_g_ref[...], ln1_b_ref[...])
    qkv = _mm(h, wqkv_ref[...]) + bqkv_ref[...]             # (B*T, 3C)

    row = jax.lax.broadcasted_iota(jnp.int32, (seq, seq), 0)
    col = jax.lax.broadcasted_iota(jnp.int32, (seq, seq), 1)
    causal = col <= row

    batch_outs = []
    for b in range(batch):                                  # static unroll
        r0 = b * seq
        head_outs = []
        for hh in range(n_head):                            # static unroll
            c0 = hh * head_dim
            q = qkv[r0:r0 + seq, c0:c0 + head_dim]           # (T, hd)
            k = qkv[r0:r0 + seq, c + c0:c + c0 + head_dim]
            v = qkv[r0:r0 + seq, 2 * c + c0:2 * c + c0 + head_dim]
            s = _mm_t(q, k) * scale                          # (T, T) scores
            s = jnp.where(causal, s, NEG_INF)
            m = jnp.max(s, axis=-1, keepdims=True)
            p = jnp.exp(s - m)
            p = p * pl.reciprocal(jnp.sum(p, axis=-1, keepdims=True),
                                  approx=True)
            head_outs.append(_mm(p, v))                      # (T, hd)
        batch_outs.append(jnp.concatenate(head_outs, axis=-1))   # (T, C)
    y = jnp.concatenate(batch_outs, axis=0)                  # (B*T, C)

    x = x + _mm(y, wproj_ref[...]) + bproj_ref[...]          # residual 1

    # ---- MLP sub-block ----
    h = _layernorm(x, ln2_g_ref[...], ln2_b_ref[...])
    h = _gelu_tanh(_mm(h, wfc_ref[...]) + bfc_ref[...])
    x = x + _mm(h, wmlp_ref[...]) + bmlp_ref[...]            # residual 2

    o_ref[...] = x.astype(o_ref.dtype)


def transformer_block(p, x2d, *, batch, seq):
    n, c = x2d.shape
    kernel = functools.partial(_block_kernel, batch=batch, seq=seq,
                               n_head=N_HEAD, head_dim=HEAD_DIM)
    return pl.pallas_call(
        kernel,
        out_shape=jax.ShapeDtypeStruct((n, c), x2d.dtype),
    )(x2d,
      p["ln1_g"], p["ln1_b"],
      p["attn_w"], p["attn_b"],
      p["attn_proj_w"], p["attn_proj_b"],
      p["ln2_g"], p["ln2_b"],
      p["fc_w"], p["fc_b"],
      p["mlp_proj_w"], p["mlp_proj_b"])


# -------------------- fused final layernorm + lm_head ----------------------- #
def _lm_head_kernel(x_ref, g_ref, b_ref, wte_ref, o_ref):
    x = x_ref[...].astype(jnp.float32)
    h = _layernorm(x, g_ref[...], b_ref[...])
    # tied weights: logits = h @ wte^T ; V=256 lanes -> lane-dense store.
    o_ref[...] = _mm_t(h, wte_ref[...]).astype(o_ref.dtype)


def lm_head(x2d, g, b, wte):
    n, _ = x2d.shape
    v = wte.shape[0]
    return pl.pallas_call(
        _lm_head_kernel,
        out_shape=jax.ShapeDtypeStruct((n, v), jnp.float32),
    )(x2d, g, b, wte)


# ------------------------------ model forward ------------------------------ #
def gpt_forward(params, idx, targets=None):
    B, T = idx.shape
    assert T <= BLOCK_SIZE
    # Embedding gather + positional add: plain-JAX glue (data-dependent gather).
    tok_emb = jnp.take(params["wte"], idx, axis=0)           # (B, T, C)
    pos_emb = params["wpe"][:T]                              # (T, C)
    x = (tok_emb + pos_emb[None, :, :]).reshape(B * T, N_EMBD)

    # One fused Pallas kernel per transformer block (3 pallas_calls total).
    for layer in params["layers"]:
        x = transformer_block(layer, x, batch=B, seq=T)

    logits = lm_head(x, params["lnf_g"], params["lnf_b"], params["wte"])
    logits = logits.reshape(B, T, VOCAB_SIZE)

    loss = None
    if targets is not None:
        # Cross-entropy on flat logits (matches F.cross_entropy) -- JAX glue.
        logp = jax.nn.log_softmax(logits.reshape(-1, VOCAB_SIZE), axis=-1)
        loss = -jnp.mean(
            jnp.take_along_axis(logp, targets.reshape(-1, 1), axis=-1))
    return logits, loss


# --------------------------- deterministic params --------------------------- #
def init_params(key):
    std = 0.02
    proj_std = std * (2 * N_LAYER) ** (-0.5)
    keys = iter(jax.random.split(key, 64))

    def normal(shape, s):
        return (s * jax.random.normal(next(keys), shape)).astype(jnp.float32)

    # LayerNorm params / biases stored 2-D so no per-call reshape op is needed.
    params = {
        "wte": normal((VOCAB_SIZE, N_EMBD), std),     # shared with lm_head
        "wpe": normal((BLOCK_SIZE, N_EMBD), std),
        "lnf_g": jnp.ones((1, N_EMBD), jnp.float32),
        "lnf_b": jnp.zeros((1, N_EMBD), jnp.float32),
        "layers": [],
    }
    for _ in range(N_LAYER):
        params["layers"].append({
            "ln1_g": jnp.ones((1, N_EMBD), jnp.float32),
            "ln1_b": jnp.zeros((1, N_EMBD), jnp.float32),
            "attn_w": normal((N_EMBD, 3 * N_EMBD), std),
            "attn_b": jnp.zeros((1, 3 * N_EMBD), jnp.float32),
            "attn_proj_w": normal((N_EMBD, N_EMBD), proj_std),
            "attn_proj_b": jnp.zeros((1, N_EMBD), jnp.float32),
            "ln2_g": jnp.ones((1, N_EMBD), jnp.float32),
            "ln2_b": jnp.zeros((1, N_EMBD), jnp.float32),
            "fc_w": normal((N_EMBD, 4 * N_EMBD), std),
            "fc_b": jnp.zeros((1, 4 * N_EMBD), jnp.float32),
            "mlp_proj_w": normal((4 * N_EMBD, N_EMBD), proj_std),
            "mlp_proj_b": jnp.zeros((1, N_EMBD), jnp.float32),
        })
    return params


# ----------------------------------- main ----------------------------------- #
if __name__ == "__main__":
    key = jax.random.PRNGKey(0)
    pkey, ikey = jax.random.split(key)
    params = init_params(pkey)

    B, T = 2, 16
    idx = jax.random.randint(ikey, (B, T), 0, VOCAB_SIZE, dtype=jnp.int32)

    logits, loss = jax.jit(gpt_forward)(params, idx)
    jax.block_until_ready(logits)

    assert logits.shape == (B, T, VOCAB_SIZE)
    assert loss is None
    print("KERNEL_OK")
</pallas_src>

<mosaic_0001>
module attributes {stable_mosaic.version = 11 : i64} {
  func.func @_lm_head_kernel(%arg0: memref<32x32xf32, #tpu.memory_space<vmem>>, %arg1: memref<1x32xf32, #tpu.memory_space<vmem>>, %arg2: memref<1x32xf32, #tpu.memory_space<vmem>>, %arg3: memref<256x32xf32, #tpu.memory_space<vmem>>, %arg4: memref<32x256xf32, #tpu.memory_space<vmem>>) attributes {dimension_semantics = [], scalar_prefetch = 0 : i64, scratch_operands = 0 : i64, tpu.core_type = #tpu.core_type<tc>} {
    %c0 = arith.constant 0 : index
    %c0_0 = arith.constant 0 : index
    %0 = vector.load %arg0[%c0, %c0_0] : memref<32x32xf32, #tpu.memory_space<vmem>>, vector<32x32xf32>
    %c0_1 = arith.constant 0 : index
    %c0_2 = arith.constant 0 : index
    %1 = vector.load %arg1[%c0_1, %c0_2] : memref<1x32xf32, #tpu.memory_space<vmem>>, vector<1x32xf32>
    %c0_3 = arith.constant 0 : index
    %c0_4 = arith.constant 0 : index
    %2 = vector.load %arg2[%c0_3, %c0_4] : memref<1x32xf32, #tpu.memory_space<vmem>>, vector<1x32xf32>
    %cst = arith.constant dense<0.000000e+00> : vector<32xf32>
    %3 = vector.multi_reduction <add>, %0, %cst [1] : vector<32x32xf32> to vector<32xf32>
    %4 = vector.shape_cast %3 : vector<32xf32> to vector<32x1xf32>
    %cst_5 = arith.constant 3.200000e+01 : f32
    %5 = vector.broadcast %cst_5 : f32 to vector<32x1xf32>
    %6 = arith.divf %4, %5 : vector<32x1xf32>
    %7 = vector.broadcast %6 : vector<32x1xf32> to vector<32x32xf32>
    %8 = arith.subf %0, %7 : vector<32x32xf32>
    %9 = arith.mulf %8, %8 : vector<32x32xf32>
    %cst_6 = arith.constant dense<0.000000e+00> : vector<32xf32>
    %10 = vector.multi_reduction <add>, %9, %cst_6 [1] : vector<32x32xf32> to vector<32xf32>
    %11 = vector.shape_cast %10 : vector<32xf32> to vector<32x1xf32>
    %cst_7 = arith.constant 3.200000e+01 : f32
    %12 = vector.broadcast %cst_7 : f32 to vector<32x1xf32>
    %13 = arith.divf %11, %12 : vector<32x1xf32>
    %14 = vector.broadcast %6 : vector<32x1xf32> to vector<32x32xf32>
    %15 = arith.subf %0, %14 : vector<32x32xf32>
    %cst_8 = arith.constant 9.99999974E-6 : f32
    %16 = vector.broadcast %cst_8 : f32 to vector<32x1xf32>
    %17 = arith.addf %13, %16 : vector<32x1xf32>
    %18 = math.rsqrt %17 : vector<32x1xf32>
    %19 = vector.broadcast %18 : vector<32x1xf32> to vector<32x32xf32>
    %20 = arith.mulf %15, %19 : vector<32x32xf32>
    %21 = vector.broadcast %1 : vector<1x32xf32> to vector<32x32xf32>
    %22 = arith.mulf %20, %21 : vector<32x32xf32>
    %23 = vector.broadcast %2 : vector<1x32xf32> to vector<32x32xf32>
    %24 = arith.addf %22, %23 : vector<32x32xf32>
    %c0_9 = arith.constant 0 : index
    %c0_10 = arith.constant 0 : index
    %25 = vector.load %arg3[%c0_9, %c0_10] : memref<256x32xf32, #tpu.memory_space<vmem>>, vector<256x32xf32>
    %26 = arith.truncf %24 : vector<32x32xf32> to vector<32x32xbf16>
    %27 = arith.truncf %25 : vector<256x32xf32> to vector<256x32xbf16>
    %cst_11 = arith.constant dense<0.000000e+00> : vector<32x256xf32>
    %28 = tpu.matmul %26, %27, %cst_11 {dimension_numbers = #tpu.dot_dimension_numbers<[1], [1], [0], [0], [0, 0, 1, 0], [], []>} : vector<32x32xbf16>, vector<256x32xbf16>, vector<32x256xf32> -> vector<32x256xf32>
    %c0_12 = arith.constant 0 : index
    %c0_13 = arith.constant 0 : index
    %29 = vector.load %arg4[%c0_12, %c0_13] : memref<32x256xf32, #tpu.memory_space<vmem>>, vector<32x256xf32>
    tpu.vector_store %arg4[%c0_12, %c0_13], %28 {strides = array<i32>} : memref<32x256xf32, #tpu.memory_space<vmem>>, vector<32x256xf32>,
    return
  }
}

module attributes {stable_mosaic.version = 11 : i64} {
  func.func @_block_kernel(%arg0: memref<32x32xf32, #tpu.memory_space<vmem>>, %arg1: memref<1x32xf32, #tpu.memory_space<vmem>>, %arg2: memref<1x32xf32, #tpu.memory_space<vmem>>, %arg3: memref<32x96xf32, #tpu.memory_space<vmem>>, %arg4: memref<1x96xf32, #tpu.memory_space<vmem>>, %arg5: memref<32x32xf32, #tpu.memory_space<vmem>>, %arg6: memref<1x32xf32, #tpu.memory_space<vmem>>, %arg7: memref<1x32xf32, #tpu.memory_space<vmem>>, %arg8: memref<1x32xf32, #tpu.memory_space<vmem>>, %arg9: memref<32x128xf32, #tpu.memory_space<vmem>>, %arg10: memref<1x128xf32, #tpu.memory_space<vmem>>, %arg11: memref<128x32xf32, #tpu.memory_space<vmem>>, %arg12: memref<1x32xf32, #tpu.memory_space<vmem>>, %arg13: memref<32x32xf32, #tpu.memory_space<vmem>>) attributes {dimension_semantics = [], scalar_prefetch = 0 : i64, scratch_operands = 0 : i64, tpu.core_type = #tpu.core_type<tc>} {
    %c0 = arith.constant 0 : index
    %c0_0 = arith.constant 0 : index
    %0 = vector.load %arg0[%c0, %c0_0] : memref<32x32xf32, #tpu.memory_space<vmem>>, vector<32x32xf32>
    %c0_1 = arith.constant 0 : index
    %c0_2 = arith.constant 0 : index
    %1 = vector.load %arg1[%c0_1, %c0_2] : memref<1x32xf32, #tpu.memory_space<vmem>>, vector<1x32xf32>
    %c0_3 = arith.constant 0 : index
    %c0_4 = arith.constant 0 : index
    %2 = vector.load %arg2[%c0_3, %c0_4] : memref<1x32xf32, #tpu.memory_space<vmem>>, vector<1x32xf32>
    %cst = arith.constant dense<0.000000e+00> : vector<32xf32>
    %3 = vector.multi_reduction <add>, %0, %cst [1] : vector<32x32xf32> to vector<32xf32>
    %4 = vector.shape_cast %3 : vector<32xf32> to vector<32x1xf32>
    %cst_5 = arith.constant 3.200000e+01 : f32
    %5 = vector.broadcast %cst_5 : f32 to vector<32x1xf32>
    %6 = arith.divf %4, %5 : vector<32x1xf32>
    %7 = vector.broadcast %6 : vector<32x1xf32> to vector<32x32xf32>
    %8 = arith.subf %0, %7 : vector<32x32xf32>
    %9 = arith.mulf %8, %8 : vector<32x32xf32>
    %cst_6 = arith.constant dense<0.000000e+00> : vector<32xf32>
    %10 = vector.multi_reduction <add>, %9, %cst_6 [1] : vector<32x32xf32> to vector<32xf32>
    %11 = vector.shape_cast %10 : vector<32xf32> to vector<32x1xf32>
    %cst_7 = arith.constant 3.200000e+01 : f32
    %12 = vector.broadcast %cst_7 : f32 to vector<32x1xf32>
    %13 = arith.divf %11, %12 : vector<32x1xf32>
    %14 = vector.broadcast %6 : vector<32x1xf32> to vector<32x32xf32>
    %15 = arith.subf %0, %14 : vector<32x32xf32>
    %cst_8 = arith.constant 9.99999974E-6 : f32
    %16 = vector.broadcast %cst_8 : f32 to vector<32x1xf32>
    %17 = arith.addf %13, %16 : vector<32x1xf32>
    %18 = math.rsqrt %17 : vector<32x1xf32>
    %19 = vector.broadcast %18 : vector<32x1xf32> to vector<32x32xf32>
    %20 = arith.mulf %15, %19 : vector<32x32xf32>
    %21 = vector.broadcast %1 : vector<1x32xf32> to vector<32x32xf32>
    %22 = arith.mulf %20, %21 : vector<32x32xf32>
    %23 = vector.broadcast %2 : vector<1x32xf32> to vector<32x32xf32>
    %24 = arith.addf %22, %23 : vector<32x32xf32>
    %c0_9 = arith.constant 0 : index
    %c0_10 = arith.constant 0 : index
    %25 = vector.load %arg3[%c0_9, %c0_10] : memref<32x96xf32, #tpu.memory_space<vmem>>, vector<32x96xf32>
    %26 = arith.truncf %24 : vector<32x32xf32> to vector<32x32xbf16>
    %27 = arith.truncf %25 : vector<32x96xf32> to vector<32x96xbf16>
    %cst_11 = arith.constant dense<0.000000e+00> : vector<32x96xf32>
    %28 = tpu.matmul %26, %27, %cst_11 {dimension_numbers = #tpu.dot_dimension_numbers<[1], [0], [0], [1], [0, 0, 1, 1], [], []>} : vector<32x32xbf16>, vector<32x96xbf16>, vector<32x96xf32> -> vector<32x96xf32>
    %c0_12 = arith.constant 0 : index
    %c0_13 = arith.constant 0 : index
    %29 = vector.load %arg4[%c0_12, %c0_13] : memref<1x96xf32, #tpu.memory_space<vmem>>, vector<1x96xf32>
    %30 = vector.broadcast %29 : vector<1x96xf32> to vector<32x96xf32>
    %31 = arith.addf %28, %30 : vector<32x96xf32>
    %32 = tpu.iota {dimensions = array<i32: 0>} : vector<16x16xi32>
    %33 = tpu.iota {dimensions = array<i32: 1>} : vector<16x16xi32>
    %34 = arith.cmpi sle, %33, %32 : vector<16x16xi32>
    %35 = vector.extract_strided_slice %31 {offsets = [0, 0], sizes = [16, 16], strides = [1, 1]} : vector<32x96xf32> to vector<16x16xf32>
    %36 = vector.extract_strided_slice %31 {offsets = [0, 32], sizes = [16, 16], strides = [1, 1]} : vector<32x96xf32> to vector<16x16xf32>
    %37 = vector.extract_strided_slice %31 {offsets = [0, 64], sizes = [16, 16], strides = [1, 1]} : vector<32x96xf32> to vector<16x16xf32>
    %38 = arith.truncf %35 : vector<16x16xf32> to vector<16x16xbf16>
    %39 = arith.truncf %36 : vector<16x16xf32> to vector<16x16xbf16>
    %cst_14 = arith.constant dense<0.000000e+00> : vector<16x16xf32>
    %40 = tpu.matmul %38, %39, %cst_14 {dimension_numbers = #tpu.dot_dimension_numbers<[1], [1], [0], [0], [0, 0, 1, 0], [], []>} : vector<16x16xbf16>, vector<16x16xbf16>, vector<16x16xf32> -> vector<16x16xf32>
    %cst_15 = arith.constant 2.500000e-01 : f32
    %41 = vector.broadcast %cst_15 : f32 to vector<16x16xf32>
    %42 = arith.mulf %40, %41 : vector<16x16xf32>
    %cst_16 = arith.constant -1.000000e+30 : f32
    %43 = vector.broadcast %cst_16 : f32 to vector<16x16xf32>
    %44 = arith.select %34, %42, %43 : vector<16x16xi1>, vector<16x16xf32>
    %cst_17 = arith.constant dense<0xFF800000> : vector<16xf32>
    %45 = vector.multi_reduction <maximumf>, %44, %cst_17 [1] : vector<16x16xf32> to vector<16xf32>
    %46 = vector.shape_cast %45 : vector<16xf32> to vector<16x1xf32>
    %47 = vector.broadcast %46 : vector<16x1xf32> to vector<16x16xf32>
    %48 = arith.subf %44, %47 : vector<16x16xf32>
    %49 = math.exp %48 : vector<16x16xf32>
    %cst_18 = arith.constant dense<0.000000e+00> : vector<16xf32>
    %50 = vector.multi_reduction <add>, %49, %cst_18 [1] : vector<16x16xf32> to vector<16xf32>
    %51 = vector.shape_cast %50 : vector<16xf32> to vector<16x1xf32>
    %52 = tpu.reciprocal %51 {approx = true} : vector<16x1xf32> -> vector<16x1xf32>
    %53 = vector.broadcast %52 : vector<16x1xf32> to vector<16x16xf32>
    %54 = arith.mulf %49, %53 : vector<16x16xf32>
    %55 = arith.truncf %54 : vector<16x16xf32> to vector<16x16xbf16>
    %56 = arith.truncf %37 : vector<16x16xf32> to vector<16x16xbf16>
    %cst_19 = arith.constant dense<0.000000e+00> : vector<16x16xf32>
    %57 = tpu.matmul %55, %56, %cst_19 {dimension_numbers = #tpu.dot_dimension_numbers<[1], [0], [0], [1], [0, 0, 1, 1], [], []>} : vector<16x16xbf16>, vector<16x16xbf16>, vector<16x16xf32> -> vector<16x16xf32>
    %58 = vector.extract_strided_slice %31 {offsets = [0, 16], sizes = [16, 16], strides = [1, 1]} : vector<32x96xf32> to vector<16x16xf32>
    %59 = vector.extract_strided_slice %31 {offsets = [0, 48], sizes = [16, 16], strides = [1, 1]} : vector<32x96xf32> to vector<16x16xf32>
    %60 = vector.extract_strided_slice %31 {offsets = [0, 80], sizes = [16, 16], strides = [1, 1]} : vector<32x96xf32> to vector<16x16xf32>
    %61 = arith.truncf %58 : vector<16x16xf32> to vector<16x16xbf16>
    %62 = arith.truncf %59 : vector<16x16xf32> to vector<16x16xbf16>
    %cst_20 = arith.constant dense<0.000000e+00> : vector<16x16xf32>
    %63 = tpu.matmul %61, %62, %cst_20 {dimension_numbers = #tpu.dot_dimension_numbers<[1], [1], [0], [0], [0, 0, 1, 0], [], []>} : vector<16x16xbf16>, vector<16x16xbf16>, vector<16x16xf32> -> vector<16x16xf32>
    %cst_21 = arith.constant 2.500000e-01 : f32
    %64 = vector.broadcast %cst_21 : f32 to vector<16x16xf32>
    %65 = arith.mulf %63, %64 : vector<16x16xf32>
    %cst_22 = arith.constant -1.000000e+30 : f32
    %66 = vector.broadcast %cst_22 : f32 to vector<16x16xf32>
    %67 = arith.select %34, %65, %66 : vector<16x16xi1>, vector<16x16xf32>
    %cst_23 = arith.constant dense<0xFF800000> : vector<16xf32>
    %68 = vector.multi_reduction <maximumf>, %67, %cst_23 [1] : vector<16x16xf32> to vector<16xf32>
    %69 = vector.shape_cast %68 : vector<16xf32> to vector<16x1xf32>
    %70 = vector.broadcast %69 : vector<16x1xf32> to vector<16x16xf32>
    %71 = arith.subf %67, %70 : vector<16x16xf32>
    %72 = math.exp %71 : vector<16x16xf32>
    %cst_24 = arith.constant dense<0.000000e+00> : vector<16xf32>
    %73 = vector.multi_reduction <add>, %72, %cst_24 [1] : vector<16x16xf32> to vector<16xf32>
    %74 = vector.shape_cast %73 : vector<16xf32> to vector<16x1xf32>
    %75 = tpu.reciprocal %74 {approx = true} : vector<16x1xf32> -> vector<16x1xf32>
    %76 = vector.broadcast %75 : vector<16x1xf32> to vector<16x16xf32>
    %77 = arith.mulf %72, %76 : vector<16x16xf32>
    %78 = arith.truncf %77 : vector<16x16xf32> to vector<16x16xbf16>
    %79 = arith.truncf %60 : vector<16x16xf32> to vector<16x16xbf16>
    %cst_25 = arith.constant dense<0.000000e+00> : vector<16x16xf32>
    %80 = tpu.matmul %78, %79, %cst_25 {dimension_numbers = #tpu.dot_dimension_numbers<[1], [0], [0], [1], [0, 0, 1, 1], [], []>} : vector<16x16xbf16>, vector<16x16xbf16>, vector<16x16xf32> -> vector<16x16xf32>
    %81 = tpu.concatenate %57, %80 in 1 : vector<16x16xf32>, vector<16x16xf32> -> vector<16x32xf32>
    %82 = vector.extract_strided_slice %31 {offsets = [16, 0], sizes = [16, 16], strides = [1, 1]} : vector<32x96xf32> to vector<16x16xf32>
    %83 = vector.extract_strided_slice %31 {offsets = [16, 32], sizes = [16, 16], strides = [1, 1]} : vector<32x96xf32> to vector<16x16xf32>
    %84 = vector.extract_strided_slice %31 {offsets = [16, 64], sizes = [16, 16], strides = [1, 1]} : vector<32x96xf32> to vector<16x16xf32>
    %85 = arith.truncf %82 : vector<16x16xf32> to vector<16x16xbf16>
    %86 = arith.truncf %83 : vector<16x16xf32> to vector<16x16xbf16>
    %cst_26 = arith.constant dense<0.000000e+00> : vector<16x16xf32>
    %87 = tpu.matmul %85, %86, %cst_26 {dimension_numbers = #tpu.dot_dimension_numbers<[1], [1], [0], [0], [0, 0, 1, 0], [], []>} : vector<16x16xbf16>, vector<16x16xbf16>, vector<16x16xf32> -> vector<16x16xf32>
    %cst_27 = arith.constant 2.500000e-01 : f32
    %88 = vector.broadcast %cst_27 : f32 to vector<16x16xf32>
    %89 = arith.mulf %87, %88 : vector<16x16xf32>
    %cst_28 = arith.constant -1.000000e+30 : f32
    %90 = vector.broadcast %cst_28 : f32 to vector<16x16xf32>
    %91 = arith.select %34, %89, %90 : vector<16x16xi1>, vector<16x16xf32>
    %cst_29 = arith.constant dense<0xFF800000> : vector<16xf32>
    %92 = vector.multi_reduction <maximumf>, %91, %cst_29 [1] : vector<16x16xf32> to vector<16xf32>
    %93 = vector.shape_cast %92 : vector<16xf32> to vector<16x1xf32>
    %94 = vector.broadcast %93 : vector<16x1xf32> to vector<16x16xf32>
    %95 = arith.subf %91, %94 : vector<16x16xf32>
    %96 = math.exp %95 : vector<16x16xf32>
    %cst_30 = arith.constant dense<0.000000e+00> : vector<16xf32>
    %97 = vector.multi_reduction <add>, %96, %cst_30 [1] : vector<16x16xf32> to vector<16xf32>
    %98 = vector.shape_cast %97 : vector<16xf32> to vector<16x1xf32>
    %99 = tpu.reciprocal %98 {approx = true} : vector<16x1xf32> -> vector<16x1xf32>
    %100 = vector.broadcast %99 : vector<16x1xf32> to vector<16x16xf32>
    %101 = arith.mulf %96, %100 : vector<16x16xf32>
    %102 = arith.truncf %101 : vector<16x16xf32> to vector<16x16xbf16>
    %103 = arith.truncf %84 : vector<16x16xf32> to vector<16x16xbf16>
    %cst_31 = arith.constant dense<0.000000e+00> : vector<16x16xf32>
    %104 = tpu.matmul %102, %103, %cst_31 {dimension_numbers = #tpu.dot_dimension_numbers<[1], [0], [0], [1], [0, 0, 1, 1], [], []>} : vector<16x16xbf16>, vector<16x16xbf16>, vector<16x16xf32> -> vector<16x16xf32>
    %105 = vector.extract_strided_slice %31 {offsets = [16, 16], sizes = [16, 16], strides = [1, 1]} : vector<32x96xf32> to vector<16x16xf32>
    %106 = vector.extract_strided_slice %31 {offsets = [16, 48], sizes = [16, 16], strides = [1, 1]} : vector<32x96xf32> to vector<16x16xf32>
    %107 = vector.extract_strided_slice %31 {offsets = [16, 80], sizes = [16, 16], strides = [1, 1]} : vector<32x96xf32> to vector<16x16xf32>
    %108 = arith.truncf %105 : vector<16x16xf32> to vector<16x16xbf16>
    %109 = arith.truncf %106 : vector<16x16xf32> to vector<16x16xbf16>
    %cst_32 = arith.constant dense<0.000000e+00> : vector<16x16xf32>
    %110 = tpu.matmul %108, %109, %cst_32 {dimension_numbers = #tpu.dot_dimension_numbers<[1], [1], [0], [0], [0, 0, 1, 0], [], []>} : vector<16x16xbf16>, vector<16x16xbf16>, vector<16x16xf32> -> vector<16x16xf32>
    %cst_33 = arith.constant 2.500000e-01 : f32
    %111 = vector.broadcast %cst_33 : f32 to vector<16x16xf32>
    %112 = arith.mulf %110, %111 : vector<16x16xf32>
    %cst_34 = arith.constant -1.000000e+30 : f32
    %113 = vector.broadcast %cst_34 : f32 to vector<16x16xf32>
    %114 = arith.select %34, %112, %113 : vector<16x16xi1>, vector<16x16xf32>
    %cst_35 = arith.constant dense<0xFF800000> : vector<16xf32>
    %115 = vector.multi_reduction <maximumf>, %114, %cst_35 [1] : vector<16x16xf32> to vector<16xf32>
    %116 = vector.shape_cast %115 : vector<16xf32> to vector<16x1xf32>
    %117 = vector.broadcast %116 : vector<16x1xf32> to vector<16x16xf32>
    %118 = arith.subf %114, %117 : vector<16x16xf32>
    %119 = math.exp %118 : vector<16x16xf32>
    %cst_36 = arith.constant dense<0.000000e+00> : vector<16xf32>
    %120 = vector.multi_reduction <add>, %119, %cst_36 [1] : vector<16x16xf32> to vector<16xf32>
    %121 = vector.shape_cast %120 : vector<16xf32> to vector<16x1xf32>
    %122 = tpu.reciprocal %121 {approx = true} : vector<16x1xf32> -> vector<16x1xf32>
    %123 = vector.broadcast %122 : vector<16x1xf32> to vector<16x16xf32>
    %124 = arith.mulf %119, %123 : vector<16x16xf32>
    %125 = arith.truncf %124 : vector<16x16xf32> to vector<16x16xbf16>
    %126 = arith.truncf %107 : vector<16x16xf32> to vector<16x16xbf16>
    %cst_37 = arith.constant dense<0.000000e+00> : vector<16x16xf32>
    %127 = tpu.matmul %125, %126, %cst_37 {dimension_numbers = #tpu.dot_dimension_numbers<[1], [0], [0], [1], [0, 0, 1, 1], [], []>} : vector<16x16xbf16>, vector<16x16xbf16>, vector<16x16xf32> -> vector<16x16xf32>
    %128 = tpu.concatenate %104, %127 in 1 : vector<16x16xf32>, vector<16x16xf32> -> vector<16x32xf32>
    %129 = tpu.concatenate %81, %128 in 0 : vector<16x32xf32>, vector<16x32xf32> -> vector<32x32xf32>
    %c0_38 = arith.constant 0 : index
    %c0_39 = arith.constant 0 : index
    %130 = vector.load %arg5[%c0_38, %c0_39] : memref<32x32xf32, #tpu.memory_space<vmem>>, vector<32x32xf32>
    %131 = arith.truncf %129 : vector<32x32xf32> to vector<32x32xbf16>
    %132 = arith.truncf %130 : vector<32x32xf32> to vector<32x32xbf16>
    %cst_40 = arith.constant dense<0.000000e+00> : vector<32x32xf32>
    %133 = tpu.matmul %131, %132, %cst_40 {dimension_numbers = #tpu.dot_dimension_numbers<[1], [0], [0], [1], [0, 0, 1, 1], [], []>} : vector<32x32xbf16>, vector<32x32xbf16>, vector<32x32xf32> -> vector<32x32xf32>
    %134 = arith.addf %0, %133 : vector<32x32xf32>
    %c0_41 = arith.constant 0 : index
    %c0_42 = arith.constant 0 : index
    %135 = vector.load %arg6[%c0_41, %c0_42] : memref<1x32xf32, #tpu.memory_space<vmem>>, vector<1x32xf32>
    %136 = vector.broadcast %135 : vector<1x32xf32> to vector<32x32xf32>
    %137 = arith.addf %134, %136 : vector<32x32xf32>
    %c0_43 = arith.constant 0 : index
    %c0_44 = arith.constant 0 : index
    %138 = vector.load %arg7[%c0_43, %c0_44] : memref<1x32xf32, #tpu.memory_space<vmem>>, vector<1x32xf32>
    %c0_45 = arith.constant 0 : index
    %c0_46 = arith.constant 0 : index
    %139 = vector.load %arg8[%c0_45, %c0_46] : memref<1x32xf32, #tpu.memory_space<vmem>>, vector<1x32xf32>
    %cst_47 = arith.constant dense<0.000000e+00> : vector<32xf32>
    %140 = vector.multi_reduction <add>, %137, %cst_47 [1] : vector<32x32xf32> to vector<32xf32>
    %141 = vector.shape_cast %140 : vector<32xf32> to vector<32x1xf32>
    %cst_48 = arith.constant 3.200000e+01 : f32
    %142 = vector.broadcast %cst_48 : f32 to vector<32x1xf32>
    %143 = arith.divf %141, %142 : vector<32x1xf32>
    %144 = vector.broadcast %143 : vector<32x1xf32> to vector<32x32xf32>
    %145 = arith.subf %137, %144 : vector<32x32xf32>
    %146 = arith.mulf %145, %145 : vector<32x32xf32>
    %cst_49 = arith.constant dense<0.000000e+00> : vector<32xf32>
    %147 = vector.multi_reduction <add>, %146, %cst_49 [1] : vector<32x32xf32> to vector<32xf32>
    %148 = vector.shape_cast %147 : vector<32xf32> to vector<32x1xf32>
    %cst_50 = arith.constant 3.200000e+01 : f32
    %149 = vector.broadcast %cst_50 : f32 to vector<32x1xf32>
    %150 = arith.divf %148, %149 : vector<32x1xf32>
    %151 = vector.broadcast %143 : vector<32x1xf32> to vector<32x32xf32>
    %152 = arith.subf %137, %151 : vector<32x32xf32>
    %cst_51 = arith.constant 9.99999974E-6 : f32
    %153 = vector.broadcast %cst_51 : f32 to vector<32x1xf32>
    %154 = arith.addf %150, %153 : vector<32x1xf32>
    %155 = math.rsqrt %154 : vector<32x1xf32>
    %156 = vector.broadcast %155 : vector<32x1xf32> to vector<32x32xf32>
    %157 = arith.mulf %152, %156 : vector<32x32xf32>
    %158 = vector.broadcast %138 : vector<1x32xf32> to vector<32x32xf32>
    %159 = arith.mulf %157, %158 : vector<32x32xf32>
    %160 = vector.broadcast %139 : vector<1x32xf32> to vector<32x32xf32>
    %161 = arith.addf %159, %160 : vector<32x32xf32>
    %c0_52 = arith.constant 0 : index
    %c0_53 = arith.constant 0 : index
    %162 = vector.load %arg9[%c0_52, %c0_53] : memref<32x128xf32, #tpu.memory_space<vmem>>, vector<32x128xf32>
    %163 = arith.truncf %161 : vector<32x32xf32> to vector<32x32xbf16>
    %164 = arith.truncf %162 : vector<32x128xf32> to vector<32x128xbf16>
    %cst_54 = arith.constant dense<0.000000e+00> : vector<32x128xf32>
    %165 = tpu.matmul %163, %164, %cst_54 {dimension_numbers = #tpu.dot_dimension_numbers<[1], [0], [0], [1], [0, 0, 1, 1], [], []>} : vector<32x32xbf16>, vector<32x128xbf16>, vector<32x128xf32> -> vector<32x128xf32>
    %c0_55 = arith.constant 0 : index
    %c0_56 = arith.constant 0 : index
    %166 = vector.load %arg10[%c0_55, %c0_56] : memref<1x128xf32, #tpu.memory_space<vmem>>, vector<1x128xf32>
    %167 = vector.broadcast %166 : vector<1x128xf32> to vector<32x128xf32>
    %168 = arith.addf %165, %167 : vector<32x128xf32>
    %cst_57 = arith.constant 5.000000e-01 : f32
    %169 = vector.broadcast %cst_57 : f32 to vector<32x128xf32>
    %170 = arith.mulf %169, %168 : vector<32x128xf32>
    %cst_58 = arith.constant 4.471500e-02 : f32
    %171 = vector.broadcast %cst_58 : f32 to vector<32x128xf32>
    %172 = arith.mulf %171, %168 : vector<32x128xf32>
    %173 = arith.mulf %172, %168 : vector<32x128xf32>
    %174 = arith.mulf %173, %168 : vector<32x128xf32>
    %175 = arith.addf %168, %174 : vector<32x128xf32>
    %cst_59 = arith.constant 0.797884583 : f32
    %176 = vector.broadcast %cst_59 : f32 to vector<32x128xf32>
    %177 = arith.mulf %176, %175 : vector<32x128xf32>
    %178 = math.tanh %177 : vector<32x128xf32>
    %cst_60 = arith.constant 1.000000e+00 : f32
    %179 = vector.broadcast %cst_60 : f32 to vector<32x128xf32>
    %180 = arith.addf %179, %178 : vector<32x128xf32>
    %181 = arith.mulf %170, %180 : vector<32x128xf32>
    %c0_61 = arith.constant 0 : index
    %c0_62 = arith.constant 0 : index
    %182 = vector.load %arg11[%c0_61, %c0_62] : memref<128x32xf32, #tpu.memory_space<vmem>>, vector<128x32xf32>
    %183 = arith.truncf %181 : vector<32x128xf32> to vector<32x128xbf16>
    %184 = arith.truncf %182 : vector<128x32xf32> to vector<128x32xbf16>
    %cst_63 = arith.constant dense<0.000000e+00> : vector<32x32xf32>
    %185 = tpu.matmul %183, %184, %cst_63 {dimension_numbers = #tpu.dot_dimension_numbers<[1], [0], [0], [1], [0, 0, 1, 1], [], []>} : vector<32x128xbf16>, vector<128x32xbf16>, vector<32x32xf32> -> vector<32x32xf32>
    %186 = arith.addf %137, %185 : vector<32x32xf32>
    %c0_64 = arith.constant 0 : index
    %c0_65 = arith.constant 0 : index
    %187 = vector.load %arg12[%c0_64, %c0_65] : memref<1x32xf32, #tpu.memory_space<vmem>>, vector<1x32xf32>
    %188 = vector.broadcast %187 : vector<1x32xf32> to vector<32x32xf32>
    %189 = arith.addf %186, %188 : vector<32x32xf32>
    %c0_66 = arith.constant 0 : index
    %c0_67 = arith.constant 0 : index
    %190 = vector.load %arg13[%c0_66, %c0_67] : memref<32x32xf32, #tpu.memory_space<vmem>>, vector<32x32xf32>
    tpu.vector_store %arg13[%c0_66, %c0_67], %189 {strides = array<i32>} : memref<32x32xf32, #tpu.memory_space<vmem>>, vector<32x32xf32>,
    return
  }
}

</mosaic_0001>

<llo_original>
// kernel: gpt_forward.5
$region0: #{gpt_forward.5}
  #allocation0 [shape = 'u32[]', space=smem, size = 0x4, offset = 0x4, fixed_abs, tag = 'smem constant byte address 0x4 - core index']
  #allocation1 [shape = 'u32[144,128]{1,0:T(1,128)}', space=vmem, size = 0x12000, scoped, tag = 'internal scratch']
  %s0 = inlined_call_operand.vmem [shape: f32[32,32], index: 0, kind: input, shape index: {}]
  %s1 = inlined_call_operand.vmem [shape: f32[1,32], index: 1, kind: input, shape index: {}]
  %s2 = inlined_call_operand.vmem [shape: f32[1,32], index: 2, kind: input, shape index: {}]
  %s3 = inlined_call_operand.vmem [shape: f32[256,32], index: 3, kind: input, shape index: {}]
  %s4 = inlined_call_operand.hbm [shape: f32[32,256], index: 4, kind: output, shape index: {}]
  %s5 = sld [smem:[#allocation0]]
  $region26: #{gpt_forward.5} parent=0
    _
  %s7 = ssub.s32 1, %s5
  %s8 = scalar_select 0, %s7, %s5
  $region1: #{gpt_forward.5} parent=0
    #allocation2 [shape = 'u8[32768]{0}', space=vmem, size = 0x8000, scoped, tag = 'output window, operand 0, single buffered']
    #allocation3 [shape = 's32[1]{0}', space=sflag, size = 0x4, scoped, tag = 'scoped memory for gpt_forward.5']
    %9 = vsyncpa [#allocation3], 0
    // Predicated region
    $region2: #{gpt_forward.5} parent=1 // pred_check
      _
    $region3: #{gpt_forward.5} parent=1 // pred_check_branch
      %11 = sbr.rel (0) target = $region5
    $region4: #{gpt_forward.5} parent=1 // pred_region
      _
    $region5: #{gpt_forward.5} parent=1 // pred_fallthru
      _
    // Predicated region
    $region6: #{gpt_forward.5} parent=1 // pred_check
      _
    $region7: #{gpt_forward.5} parent=1 // pred_check_branch
      %13 = sbr.rel (0) target = $region9
    $region8: #{gpt_forward.5} parent=1 // pred_region
      _
    $region9: #{gpt_forward.5} parent=1 // pred_fallthru
      _
    // Predicated region
    $region10: #{gpt_forward.5} parent=1 // pred_check
      _
    $region11: #{gpt_forward.5} parent=1 // pred_check_branch
      %15 = sbr.rel (0) target = $region13
    $region12: #{gpt_forward.5} parent=1 // pred_region
      _
    $region13: #{gpt_forward.5} parent=1 // pred_fallthru
      _
    // Predicated region
    $region14: #{gpt_forward.5} parent=1 // pred_check
      _
    $region15: #{gpt_forward.5} parent=1 // pred_check_branch
      %17 = sbr.rel (0) target = $region17
    $region16: #{gpt_forward.5} parent=1 // pred_region
      _
    $region17: #{gpt_forward.5} parent=1 // pred_fallthru
      _
    %v19 = vld [vmem:[%s0] sm:$0xff]
    %v20 = vld [vmem:[%s0 + $0x8] sm:$0xff]
    %v21 = vld [vmem:[%s0 + $0x10] sm:$0xff]
    %v22 = vld [vmem:[%s0 + $0x18] sm:$0xff]
    %v23 = vld [vmem:[%s1] sm:$0x1]
    %v24 = vld [vmem:[%s2] sm:$0x1]
    %vm25 = vcmask 261120
    %v26 = vsel %vm25, %v19, 0.0
    %27 = vadd.xlane.f32.xlu0 %v26
    %v28 = vpop.xlane.xlu0 %27
    %v29 = vsel %vm25, %v20, 0.0
    %30 = vadd.xlane.f32.xlu0 %v29
    %v31 = vpop.xlane.xlu0 %30
    %v32 = vsel %vm25, %v21, 0.0
    %33 = vadd.xlane.f32.xlu0 %v32
    %v34 = vpop.xlane.xlu0 %33
    %v35 = vsel %vm25, %v22, 0.0
    %36 = vadd.xlane.f32.xlu0 %v35
    %v37 = vpop.xlane.xlu0 %36
    %v38 = vrcp.pop 32.0
    %v39 = vmul.f32 %v28, %v38
    %v40 = vmul.f32 %v31, %v38
    %v41 = vmul.f32 %v34, %v38
    %v42 = vmul.f32 %v37, %v38
    %v43 = vsub.f32 %v19, %v39
    %v44 = vsub.f32 %v20, %v40
    %v45 = vsub.f32 %v21, %v41
    %v46 = vsub.f32 %v22, %v42
    %v47 = vmul.f32 %v43, %v43
    %v48 = vmul.f32 %v44, %v44
    %v49 = vmul.f32 %v45, %v45
    %v50 = vmul.f32 %v46, %v46
    %v51 = vsel %vm25, %v47, 0.0
    %52 = vadd.xlane.f32.xlu0 %v51
    %v53 = vpop.xlane.xlu0 %52
    %v54 = vsel %vm25, %v48, 0.0
    %55 = vadd.xlane.f32.xlu0 %v54
    %v56 = vpop.xlane.xlu0 %55
    %v57 = vsel %vm25, %v49, 0.0
    %58 = vadd.xlane.f32.xlu0 %v57
    %v59 = vpop.xlane.xlu0 %58
    %v60 = vsel %vm25, %v50, 0.0
    %61 = vadd.xlane.f32.xlu0 %v60
    %v62 = vpop.xlane.xlu0 %61
    %v63 = vmul.f32 %v53, %v38
    %v64 = vmul.f32 %v56, %v38
    %v65 = vmul.f32 %v59, %v38
    %v66 = vmul.f32 %v62, %v38
    %v67 = vadd.f32 %v63, 1e-05
    %v68 = vadd.f32 %v64, 1e-05
    %v69 = vadd.f32 %v65, 1e-05
    %v70 = vadd.f32 %v66, 1e-05
    %v71 = vrsqrt.pop %v67
    %v72 = vrsqrt.pop %v68
    %v73 = vrsqrt.pop %v69
    %v74 = vrsqrt.pop %v70
    %v75 = vmul.f32 %v43, %v71
    %v76 = vmul.f32 %v44, %v72
    %v77 = vmul.f32 %v45, %v73
    %v78 = vmul.f32 %v46, %v74
    %v80 = vlaneseq
    %v81 = vshrl.u32 %v80, 7
    %v82 = vsub.s32 0, %v81
    %v83 = vrot.slane %v23, %v82
    %v85 = vmul.f32 %v75, %v83
    %v86 = vmul.f32 %v76, %v83
    %v87 = vmul.f32 %v77, %v83
    %v88 = vmul.f32 %v78, %v83
    %v90 = vlaneseq
    %v91 = vshrl.u32 %v90, 7
    %v92 = vsub.s32 0, %v91
    %v93 = vrot.slane %v24, %v92
    %v95 = vadd.f32 %v85, %v93
    %v96 = vadd.f32 %v86, %v93
    %v97 = vadd.f32 %v87, %v93
    %v98 = vadd.f32 %v88, %v93
    %v99 = vld [vmem:[%s3] sm:$0xff]
    %v100 = vld [vmem:[%s3 + $0x8] sm:$0xff]
    %v101 = vld [vmem:[%s3 + $0x10] sm:$0xff]
    %v102 = vld [vmem:[%s3 + $0x18] sm:$0xff]
    %v103 = vld [vmem:[%s3 + $0x20] sm:$0xff]
    %v104 = vld [vmem:[%s3 + $0x28] sm:$0xff]
    %v105 = vld [vmem:[%s3 + $0x30] sm:$0xff]
    %v106 = vld [vmem:[%s3 + $0x38] sm:$0xff]
    %v107 = vld [vmem:[%s3 + $0x40] sm:$0xff]
    %v108 = vld [vmem:[%s3 + $0x48] sm:$0xff]
    %v109 = vld [vmem:[%s3 + $0x50] sm:$0xff]
    %v110 = vld [vmem:[%s3 + $0x58] sm:$0xff]
    %v111 = vld [vmem:[%s3 + $0x60] sm:$0xff]
    %v112 = vld [vmem:[%s3 + $0x68] sm:$0xff]
    %v113 = vld [vmem:[%s3 + $0x70] sm:$0xff]
    %v114 = vld [vmem:[%s3 + $0x78] sm:$0xff]
    %v115 = vld [vmem:[%s3 + $0x80] sm:$0xff]
    %v116 = vld [vmem:[%s3 + $0x88] sm:$0xff]
    %v117 = vld [vmem:[%s3 + $0x90] sm:$0xff]
    %v118 = vld [vmem:[%s3 + $0x98] sm:$0xff]
    %v119 = vld [vmem:[%s3 + $0xa0] sm:$0xff]
    %v120 = vld [vmem:[%s3 + $0xa8] sm:$0xff]
    %v121 = vld [vmem:[%s3 + $0xb0] sm:$0xff]
    %v122 = vld [vmem:[%s3 + $0xb8] sm:$0xff]
    %v123 = vld [vmem:[%s3 + $0xc0] sm:$0xff]
    %v124 = vld [vmem:[%s3 + $0xc8] sm:$0xff]
    %v125 = vld [vmem:[%s3 + $0xd0] sm:$0xff]
    %v126 = vld [vmem:[%s3 + $0xd8] sm:$0xff]
    %v127 = vld [vmem:[%s3 + $0xe0] sm:$0xff]
    %v128 = vld [vmem:[%s3 + $0xe8] sm:$0xff]
    %v129 = vld [vmem:[%s3 + $0xf0] sm:$0xff]
    %v130 = vld [vmem:[%s3 + $0xf8] sm:$0xff]
    %v131 = vpack.c.bf16 %v96, %v95
    %v132 = vpack.c.bf16 %v98, %v97
    %v133 = vpack.c.bf16 %v100, %v99
    %v134 = vpack.c.bf16 %v102, %v101
    %v135 = vpack.c.bf16 %v104, %v103
    %v136 = vpack.c.bf16 %v106, %v105
    %v137 = vpack.c.bf16 %v108, %v107
    %v138 = vpack.c.bf16 %v110, %v109
    %v139 = vpack.c.bf16 %v112, %v111
    %v140 = vpack.c.bf16 %v114, %v113
    %v141 = vpack.c.bf16 %v116, %v115
    %v142 = vpack.c.bf16 %v118, %v117
    %v143 = vpack.c.bf16 %v120, %v119
    %v144 = vpack.c.bf16 %v122, %v121
    %v145 = vpack.c.bf16 %v124, %v123
    %v146 = vpack.c.bf16 %v126, %v125
    %v147 = vpack.c.bf16 %v128, %v127
    %v148 = vpack.c.bf16 %v130, %v129
    %v150 = vsel %vm25, %v131, 0
    %v153 = vsel %vm25, %v132, 0
    %v156 = vsel %vm25, %v133, 0
    %v159 = vsel %vm25, %v134, 0
    %v162 = vsel %vm25, %v135, 0
    %v165 = vsel %vm25, %v136, 0
    %v168 = vsel %vm25, %v137, 0
    %v171 = vsel %vm25, %v138, 0
    %v174 = vsel %vm25, %v139, 0
    %v177 = vsel %vm25, %v140, 0
    %v180 = vsel %vm25, %v141, 0
    %v183 = vsel %vm25, %v142, 0
    %v186 = vsel %vm25, %v143, 0
    %v189 = vsel %vm25, %v144, 0
    %v192 = vsel %vm25, %v145, 0
    %v195 = vsel %vm25, %v146, 0
    %v198 = vsel %vm25, %v147, 0
    %v201 = vsel %vm25, %v148, 0
    %203 = vmatprep.subr.bf16.mxu0 0
    %204 = vmatpush1.bf16.xpose.msra.mxu0 %v177
    %205 = vmatprep.subr.bf16.mxu0 0
    %206 = vmatpush1.bf16.xpose.msra.mxu0 %v174
    %207 = vmatprep.subr.bf16.mxu0 0
    %208 = vmatpush1.bf16.xpose.msra.mxu0 %v171
    %209 = vmatprep.subr.bf16.mxu0 0
    %210 = vmatpush1.bf16.xpose.msra.mxu0 %v168
    %211 = vmatprep.subr.bf16.mxu0 0
    %212 = vmatpush1.bf16.xpose.msra.mxu0 %v165
    %213 = vmatprep.subr.bf16.mxu0 0
    %214 = vmatpush1.bf16.xpose.msra.mxu0 %v162
    %215 = vmatprep.subr.bf16.mxu0 0
    %216 = vmatpush1.bf16.xpose.msra.mxu0 %v159
    %217 = vmatprep.subr.bf16.mxu0 0
    %218 = vmatpush1.bf16.xpose.msra.mxu0 %v156
    %219 = vmatprep.subr.bf16.mxu0 0
    %220 = vmatpush2.bf16.xpose.msra.mxu0 %v201
    %221 = vmatprep.subr.bf16.mxu0 0
    %222 = vmatpush2.bf16.xpose.msra.mxu0 %v198
    %223 = vmatprep.subr.bf16.mxu0 0
    %224 = vmatpush2.bf16.xpose.msra.mxu0 %v195
    %225 = vmatprep.subr.bf16.mxu0 0
    %226 = vmatpush2.bf16.xpose.msra.mxu0 %v192
    %227 = vmatprep.subr.bf16.mxu0 0
    %228 = vmatpush2.bf16.xpose.msra.mxu0 %v189
    %229 = vmatprep.subr.bf16.mxu0 0
    %230 = vmatpush2.bf16.xpose.msra.mxu0 %v186
    %231 = vmatprep.subr.bf16.mxu0 0
    %232 = vmatpush2.bf16.xpose.msra.mxu0 %v183
    %233 = vmatprep.subr.bf16.mxu0 0
    %234 = vmatpush2.bf16.xpose.msra.mxu0 %v180
    %235 = vmatprep.mubr.bf16.mxu0 0
    %236 = vmatmul.mubr.bf16.gmra.mxu0 %v150
    %v237 = vpop.f32.mrf.mxu0
    %v238 = vadd.f32 0.0, %v237
    %v239 = vpop.f32.mrf.mxu0
    %v240 = vadd.f32 0.0, %v239
    %v241 = vpop.f32.mrf.mxu0
    %v242 = vadd.f32 0.0, %v241
    %v243 = vpop.f32.mrf.mxu0
    %v244 = vadd.f32 0.0, %v243
    %245 = vmatprep.mubr.bf16.mxu0 0
    %246 = vmatmul.mubr.bf16.gmra.mxu0 %v153
    %v247 = vpop.f32.mrf.mxu0
    %v248 = vadd.f32 0.0, %v247
    %v249 = vpop.f32.mrf.mxu0
    %v250 = vadd.f32 0.0, %v249
    %v251 = vpop.f32.mrf.mxu0
    %v252 = vadd.f32 0.0, %v251
    %v253 = vpop.f32.mrf.mxu0
    %v254 = vadd.f32 0.0, %v253
    %255 = vdwg.mxu0
    %256 = vst [vmem:[#allocation2] sm:$0xff] %v238
    %257 = vst [vmem:[#allocation2 + $0x8] sm:$0xff] %v240
    %258 = vst [vmem:[#allocation2 + $0x10] sm:$0xff] %v242
    %259 = vst [vmem:[#allocation2 + $0x18] sm:$0xff] %v244
    %260 = vst [vmem:[#allocation2 + $0x20] sm:$0xff] %v248
    %261 = vst [vmem:[#allocation2 + $0x28] sm:$0xff] %v250
    %262 = vst [vmem:[#allocation2 + $0x30] sm:$0xff] %v252
    %263 = vst [vmem:[#allocation2 + $0x38] sm:$0xff] %v254
    // Predicated region
    $region18: #{gpt_forward.5} parent=1 // pred_check
      _
    $region19: #{gpt_forward.5} parent=1 // pred_check_branch
      %265 = sbr.rel (0) target = $region21
    $region20: #{gpt_forward.5} parent=1 // pred_region
      %s267 = ssub.s32 1024, 1024
      %268 = vsyncadd [#allocation3], %s267
      %s269 = sshll.u32 [#allocation2], 4
      %s270 = int_to_ptr.vmem [resolvable:$true] %s269
      %275 = dma.vmem_to_hbm [thread:$0]  %s270, 1024, %s4, [#allocation3], 256, 256, 16
    $region21: #{gpt_forward.5} parent=1 // pred_fallthru
      _
    // Predicated region
    $region22: #{gpt_forward.5} parent=1 // pred_check
      _
    $region23: #{gpt_forward.5} parent=1 // pred_check_branch
      %277 = sbr.rel (0) target = $region25
    $region24: #{gpt_forward.5} parent=1 // pred_region
      %278 = dma.done [#allocation3], 1024
    $region25: #{gpt_forward.5} parent=1 // pred_fallthru
      _
    %279 = vsyncpa [#allocation3], 1

// kernel: gpt_forward.3
$region0: #{gpt_forward.3}
  #allocation0 [shape = 'u32[]', space=smem, size = 0x4, offset = 0x4, fixed_abs, tag = 'smem constant byte address 0x4 - core index']
  #allocation1 [shape = 'u32[144,128]{1,0:T(1,128)}', space=vmem, size = 0x12000, scoped, tag = 'internal scratch']
  %s0 = inlined_call_operand.vmem [shape: f32[32,32], index: 0, kind: input, shape index: {}]
  %s1 = inlined_call_operand.vmem [shape: f32[1,32], index: 1, kind: input, shape index: {}]
  %s2 = inlined_call_operand.vmem [shape: f32[1,32], index: 2, kind: input, shape index: {}]
  %s3 = inlined_call_operand.vmem [shape: f32[32,96], index: 3, kind: input, shape index: {}]
  %s4 = inlined_call_operand.vmem [shape: f32[1,96], index: 4, kind: input, shape index: {}]
  %s5 = inlined_call_operand.vmem [shape: f32[32,32], index: 5, kind: input, shape index: {}]
  %s6 = inlined_call_operand.vmem [shape: f32[1,32], index: 6, kind: input, shape index: {}]
  %s7 = inlined_call_operand.vmem [shape: f32[1,32], index: 7, kind: input, shape index: {}]
  %s8 = inlined_call_operand.vmem [shape: f32[1,32], index: 8, kind: input, shape index: {}]
  %s9 = inlined_call_operand.vmem [shape: f32[32,128], index: 9, kind: input, shape index: {}]
  %s10 = inlined_call_operand.vmem [shape: f32[1,128], index: 10, kind: input, shape index: {}]
  %s11 = inlined_call_operand.vmem [shape: f32[128,32], index: 11, kind: input, shape index: {}]
  %s12 = inlined_call_operand.vmem [shape: f32[1,32], index: 12, kind: input, shape index: {}]
  %s13 = inlined_call_operand.vmem [shape: f32[32,32], index: 13, kind: output, shape index: {}]
  %s14 = sld [smem:[#allocation0]]
  $region62: #{gpt_forward.3} parent=0
    _
  %s16 = ssub.s32 1, %s14
  %s17 = scalar_select 0, %s16, %s14
  // Predicated region
  $region2: #{gpt_forward.3} parent=0 // pred_check
    _
  $region3: #{gpt_forward.3} parent=0 // pred_check_branch
    %19 = sbr.rel (0) target = $region5
  $region4: #{gpt_forward.3} parent=0 // pred_region
    _
  $region5: #{gpt_forward.3} parent=0 // pred_fallthru
    _
  // Predicated region
  $region6: #{gpt_forward.3} parent=0 // pred_check
    _
  $region7: #{gpt_forward.3} parent=0 // pred_check_branch
    %21 = sbr.rel (0) target = $region9
  $region8: #{gpt_forward.3} parent=0 // pred_region
    _
  $region9: #{gpt_forward.3} parent=0 // pred_fallthru
    _
  // Predicated region
  $region10: #{gpt_forward.3} parent=0 // pred_check
    _
  $region11: #{gpt_forward.3} parent=0 // pred_check_branch
    %23 = sbr.rel (0) target = $region13
  $region12: #{gpt_forward.3} parent=0 // pred_region
    _
  $region13: #{gpt_forward.3} parent=0 // pred_fallthru
    _
  // Predicated region
  $region14: #{gpt_forward.3} parent=0 // pred_check
    _
  $region15: #{gpt_forward.3} parent=0 // pred_check_branch
    %25 = sbr.rel (0) target = $region17
  $region16: #{gpt_forward.3} parent=0 // pred_region
    _
  $region17: #{gpt_forward.3} parent=0 // pred_fallthru
    _
  // Predicated region
  $region18: #{gpt_forward.3} parent=0 // pred_check
    _
  $region19: #{gpt_forward.3} parent=0 // pred_check_branch
    %27 = sbr.rel (0) target = $region21
  $region20: #{gpt_forward.3} parent=0 // pred_region
    _
  $region21: #{gpt_forward.3} parent=0 // pred_fallthru
    _
  // Predicated region
  $region22: #{gpt_forward.3} parent=0 // pred_check
    _
  $region23: #{gpt_forward.3} parent=0 // pred_check_branch
    %29 = sbr.rel (0) target = $region25
  $region24: #{gpt_forward.3} parent=0 // pred_region
    _
  $region25: #{gpt_forward.3} parent=0 // pred_fallthru
    _
  // Predicated region
  $region26: #{gpt_forward.3} parent=0 // pred_check
    _
  $region27: #{gpt_forward.3} parent=0 // pred_check_branch
    %31 = sbr.rel (0) target = $region29
  $region28: #{gpt_forward.3} parent=0 // pred_region
    _
  $region29: #{gpt_forward.3} parent=0 // pred_fallthru
    _
  // Predicated region
  $region30: #{gpt_forward.3} parent=0 // pred_check
    _
  $region31: #{gpt_forward.3} parent=0 // pred_check_branch
    %33 = sbr.rel (0) target = $region33
  $region32: #{gpt_forward.3} parent=0 // pred_region
    _
  $region33: #{gpt_forward.3} parent=0 // pred_fallthru
    _
  // Predicated region
  $region34: #{gpt_forward.3} parent=0 // pred_check
    _
  $region35: #{gpt_forward.3} parent=0 // pred_check_branch
    %35 = sbr.rel (0) target = $region37
  $region36: #{gpt_forward.3} parent=0 // pred_region
    _
  $region37: #{gpt_forward.3} parent=0 // pred_fallthru
    _
  // Predicated region
  $region38: #{gpt_forward.3} parent=0 // pred_check
    _
  $region39: #{gpt_forward.3} parent=0 // pred_check_branch
    %37 = sbr.rel (0) target = $region41
  $region40: #{gpt_forward.3} parent=0 // pred_region
    _
  $region41: #{gpt_forward.3} parent=0 // pred_fallthru
    _
  // Predicated region
  $region42: #{gpt_forward.3} parent=0 // pred_check
    _
  $region43: #{gpt_forward.3} parent=0 // pred_check_branch
    %39 = sbr.rel (0) target = $region45
  $region44: #{gpt_forward.3} parent=0 // pred_region
    _
  $region45: #{gpt_forward.3} parent=0 // pred_fallthru
    _
  // Predicated region
  $region46: #{gpt_forward.3} parent=0 // pred_check
    _
  $region47: #{gpt_forward.3} parent=0 // pred_check_branch
    %41 = sbr.rel (0) target = $region49
  $region48: #{gpt_forward.3} parent=0 // pred_region
    _
  $region49: #{gpt_forward.3} parent=0 // pred_fallthru
    _
  // Predicated region
  $region50: #{gpt_forward.3} parent=0 // pred_check
    _
  $region51: #{gpt_forward.3} parent=0 // pred_check_branch
    %43 = sbr.rel (0) target = $region53
  $region52: #{gpt_forward.3} parent=0 // pred_region
    _
  $region53: #{gpt_forward.3} parent=0 // pred_fallthru
    _
  %v45 = vld [vmem:[%s0] sm:$0xff]
  %v46 = vld [vmem:[%s0 + $0x8] sm:$0xff]
  %v47 = vld [vmem:[%s0 + $0x10] sm:$0xff]
  %v48 = vld [vmem:[%s0 + $0x18] sm:$0xff]
  %v49 = vld [vmem:[%s1] sm:$0x1]
  %v50 = vld [vmem:[%s2] sm:$0x1]
  %vm51 = vcmask 261120
  %v52 = vsel %vm51, %v45, 0.0
  %53 = vadd.xlane.f32.xlu0 %v52
  %v54 = vpop.xlane.xlu0 %53
  %v55 = vsel %vm51, %v46, 0.0
  %56 = vadd.xlane.f32.xlu0 %v55
  %v57 = vpop.xlane.xlu0 %56
  %v58 = vsel %vm51, %v47, 0.0
  %59 = vadd.xlane.f32.xlu0 %v58
  %v60 = vpop.xlane.xlu0 %59
  %v61 = vsel %vm51, %v48, 0.0
  %62 = vadd.xlane.f32.xlu0 %v61
  %v63 = vpop.xlane.xlu0 %62
  %v64 = vrcp.pop 32.0
  %v65 = vmul.f32 %v54, %v64
  %v66 = vmul.f32 %v57, %v64
  %v67 = vmul.f32 %v60, %v64
  %v68 = vmul.f32 %v63, %v64
  %v69 = vsub.f32 %v45, %v65
  %v70 = vsub.f32 %v46, %v66
  %v71 = vsub.f32 %v47, %v67
  %v72 = vsub.f32 %v48, %v68
  %v73 = vmul.f32 %v69, %v69
  %v74 = vmul.f32 %v70, %v70
  %v75 = vmul.f32 %v71, %v71
  %v76 = vmul.f32 %v72, %v72
  %v77 = vsel %vm51, %v73, 0.0
  %78 = vadd.xlane.f32.xlu0 %v77
  %v79 = vpop.xlane.xlu0 %78
  %v80 = vsel %vm51, %v74, 0.0
  %81 = vadd.xlane.f32.xlu0 %v80
  %v82 = vpop.xlane.xlu0 %81
  %v83 = vsel %vm51, %v75, 0.0
  %84 = vadd.xlane.f32.xlu0 %v83
  %v85 = vpop.xlane.xlu0 %84
  %v86 = vsel %vm51, %v76, 0.0
  %87 = vadd.xlane.f32.xlu0 %v86
  %v88 = vpop.xlane.xlu0 %87
  %v89 = vmul.f32 %v79, %v64
  %v90 = vmul.f32 %v82, %v64
  %v91 = vmul.f32 %v85, %v64
  %v92 = vmul.f32 %v88, %v64
  %v93 = vadd.f32 %v89, 1e-05
  %v94 = vadd.f32 %v90, 1e-05
  %v95 = vadd.f32 %v91, 1e-05
  %v96 = vadd.f32 %v92, 1e-05
  %v97 = vrsqrt.pop %v93
  %v98 = vrsqrt.pop %v94
  %v99 = vrsqrt.pop %v95
  %v100 = vrsqrt.pop %v96
  %v101 = vmul.f32 %v69, %v97
  %v102 = vmul.f32 %v70, %v98
  %v103 = vmul.f32 %v71, %v99
  %v104 = vmul.f32 %v72, %v100
  %v106 = vlaneseq
  %v107 = vshrl.u32 %v106, 7
  %v108 = vsub.s32 0, %v107
  %v109 = vrot.slane %v49, %v108
  %v111 = vmul.f32 %v101, %v109
  %v112 = vmul.f32 %v102, %v109
  %v113 = vmul.f32 %v103, %v109
  %v114 = vmul.f32 %v104, %v109
  %v116 = vlaneseq
  %v117 = vshrl.u32 %v116, 7
  %v118 = vsub.s32 0, %v117
  %v119 = vrot.slane %v50, %v118
  %v121 = vadd.f32 %v111, %v119
  %v122 = vadd.f32 %v112, %v119
  %v123 = vadd.f32 %v113, %v119
  %v124 = vadd.f32 %v114, %v119
  %v125 = vld [vmem:[%s3] sm:$0xff]
  %v126 = vld [vmem:[%s3 + $0x8] sm:$0xff]
  %v127 = vld [vmem:[%s3 + $0x10] sm:$0xff]
  %v128 = vld [vmem:[%s3 + $0x18] sm:$0xff]
  %v129 = vpack.c.bf16 %v122, %v121
  %v130 = vpack.c.bf16 %v124, %v123
  %v131 = vpack.c.bf16 %v126, %v125
  %v132 = vpack.c.bf16 %v128, %v127
  %v133 = vld [vmem:[%s4] sm:$0x1]
  %v135 = vlaneseq
  %v136 = vshrl.u32 %v135, 7
  %v137 = vsub.s32 0, %v136
  %v138 = vrot.slane %v133, %v137
  %v141 = vsel %vm51, %v129, 0
  %v144 = vsel %vm51, %v130, 0
  %146 = vmatprep.subr.bf16.mxu0 0
  %147 = vmatpush1.bf16.msra.mxu0 0
  %148 = vmatprep.subr.bf16.mxu0 0
  %149 = vmatpush1.bf16.msra.mxu0 0
  %150 = vmatprep.subr.bf16.mxu0 0
  %151 = vmatpush1.bf16.msra.mxu0 0
  %152 = vmatprep.subr.bf16.mxu0 0
  %153 = vmatpush1.bf16.msra.mxu0 0
  %154 = vmatprep.subr.bf16.mxu0 0
  %155 = vmatpush1.bf16.msra.mxu0 0
  %156 = vmatprep.subr.bf16.mxu0 0
  %157 = vmatpush1.bf16.msra.mxu0 0
  %158 = vmatprep.subr.bf16.mxu0 0
  %159 = vmatpush1.bf16.msra.mxu0 %v132
  %160 = vmatprep.subr.bf16.mxu0 0
  %161 = vmatpush1.bf16.msra.mxu0 %v131
  %162 = vmatprep.subr.bf16.mxu0 0
  %163 = vmatpush2.bf16.msra.mxu0 0
  %164 = vmatprep.subr.bf16.mxu0 0
  %165 = vmatpush2.bf16.msra.mxu0 0
  %166 = vmatprep.subr.bf16.mxu0 0
  %167 = vmatpush2.bf16.msra.mxu0 0
  %168 = vmatprep.subr.bf16.mxu0 0
  %169 = vmatpush2.bf16.msra.mxu0 0
  %170 = vmatprep.subr.bf16.mxu0 0
  %171 = vmatpush2.bf16.msra.mxu0 0
  %172 = vmatprep.subr.bf16.mxu0 0
  %173 = vmatpush2.bf16.msra.mxu0 0
  %174 = vmatprep.subr.bf16.mxu0 0
  %175 = vmatpush2.bf16.msra.mxu0 0
  %176 = vmatprep.subr.bf16.mxu0 0
  %177 = vmatpush2.bf16.msra.mxu0 0
  %178 = vmatprep.mubr.bf16.mxu0 0
  %179 = vmatmul.mubr.bf16.gmra.mxu0 %v141
  %v180 = vpop.f32.mrf.mxu0
  %v181 = vadd.f32 %v138, %v180
  %v182 = vpop.f32.mrf.mxu0
  %v183 = vpop.f32.mrf.mxu0
  %v184 = vadd.f32 %v138, %v183
  %v185 = vpop.f32.mrf.mxu0
  %186 = vmatprep.mubr.bf16.mxu0 0
  %187 = vmatmul.mubr.bf16.gmra.mxu0 %v144
  %v188 = vpop.f32.mrf.mxu0
  %v189 = vadd.f32 %v138, %v188
  %v190 = vpop.f32.mrf.mxu0
  %v191 = vpop.f32.mrf.mxu0
  %v192 = vadd.f32 %v138, %v191
  %v193 = vpop.f32.mrf.mxu0
  %194 = vdwg.mxu0
  %v195 = vlaneseq
  %v196 = vshrl.u32 %v195, 7
  %v197 = vadd.s32 %v196, 8
  %v198 = vlaneseq
  %v199 = vand.u32 %v198, 127
  %vm200 = vcmp.le.s32.totalorder %v199, %v196
  %vm201 = vcmp.le.s32.totalorder %v199, %v197
  %v202 = vpack.c.bf16 %v184, %v181
  %204 = vrot.lane.b32.xlu0 %v202, 96
  %v205 = vpop.permute.xlu0 %204
  %vm206 = vcmask 130048
  %v208 = vsel %vm206, %v202, 0
  %v211 = vsel %vm206, %v205, 0
  %213 = vmatprep.subr.bf16.mxu0 0
  %214 = vmatpush1.bf16.xpose.msra.mxu0 0
  %215 = vmatprep.subr.bf16.mxu0 0
  %216 = vmatpush1.bf16.xpose.msra.mxu0 0
  %217 = vmatprep.subr.bf16.mxu0 0
  %218 = vmatpush1.bf16.xpose.msra.mxu0 0
  %219 = vmatprep.subr.bf16.mxu0 0
  %220 = vmatpush1.bf16.xpose.msra.mxu0 0
  %221 = vmatprep.subr.bf16.mxu0 0
  %222 = vmatpush1.bf16.xpose.msra.mxu0 0
  %223 = vmatprep.subr.bf16.mxu0 0
  %224 = vmatpush1.bf16.xpose.msra.mxu0 0
  %225 = vmatprep.subr.bf16.mxu0 0
  %226 = vmatpush1.bf16.xpose.msra.mxu0 0
  %227 = vmatprep.subr.bf16.mxu0 0
  %228 = vmatpush1.bf16.xpose.msra.mxu0 %v211
  %229 = vmatprep.subr.bf16.mxu0 0
  %230 = vmatpush2.bf16.xpose.msra.mxu0 0
  %231 = vmatprep.subr.bf16.mxu0 0
  %232 = vmatpush2.bf16.xpose.msra.mxu0 0
  %233 = vmatprep.subr.bf16.mxu0 0
  %234 = vmatpush2.bf16.xpose.msra.mxu0 0
  %235 = vmatprep.subr.bf16.mxu0 0
  %236 = vmatpush2.bf16.xpose.msra.mxu0 0
  %237 = vmatprep.subr.bf16.mxu0 0
  %238 = vmatpush2.bf16.xpose.msra.mxu0 0
  %239 = vmatprep.subr.bf16.mxu0 0
  %240 = vmatpush2.bf16.xpose.msra.mxu0 0
  %241 = vmatprep.subr.bf16.mxu0 0
  %242 = vmatpush2.bf16.xpose.msra.mxu0 0
  %243 = vmatprep.subr.bf16.mxu0 0
  %244 = vmatpush2.bf16.xpose.msra.mxu0 0
  %245 = vmatprep.mubr.bf16.mxu0 0
  %246 = vmatmul.mubr.bf16.gmra.mxu0 %v208
  %v247 = vpop.f32.mrf.mxu0
  %v248 = vadd.f32 0.0, %v247
  %v249 = vpop.f32.mrf.mxu0
  %v250 = vpop.f32.mrf.mxu0
  %v251 = vadd.f32 0.0, %v250
  %v252 = vpop.f32.mrf.mxu0
  %253 = vdwg.mxu0
  %v254 = vmul.f32 %v248, 0.25
  %v255 = vmul.f32 %v251, 0.25
  %v256 = vsel %vm200, %v254, -1e+30
  %v257 = vsel %vm201, %v255, -1e+30
  %v258 = vsel %vm206, %v256, -inf
  %259 = vmax.xlane.f32.xlu0 %v258
  %v260 = vpop.xlane.xlu0 %259
  %v261 = vsel %vm206, %v257, -inf
  %262 = vmax.xlane.f32.xlu0 %v261
  %v263 = vpop.xlane.xlu0 %262
  %v264 = vsub.f32 %v256, %v260
  %v265 = vsub.f32 %v257, %v263
  %v266 = vmul.f32 %v264, 1.442695
  %v267 = vpow.pop %v266
  %v268 = vmul.f32 %v265, 1.442695
  %v269 = vpow.pop %v268
  %v270 = vsel %vm206, %v267, 0.0
  %271 = vadd.xlane.f32.xlu0 %v270
  %v272 = vpop.xlane.xlu0 %271
  %v273 = vsel %vm206, %v269, 0.0
  %274 = vadd.xlane.f32.xlu0 %v273
  %v275 = vpop.xlane.xlu0 %274
  %v276 = vrcp.pop %v272
  %v277 = vrcp.pop %v275
  %v278 = vmul.f32 %v267, %v276
  %v279 = vmul.f32 %v269, %v277
  %v280 = vpack.c.bf16 %v279, %v278
  %281 = vrot.lane.b32.xlu0 %v202, 64
  %v282 = vpop.permute.xlu0 %281
  %v285 = vsel %vm206, %v280, 0
  %287 = vmatprep.subr.bf16.mxu0 0
  %288 = vmatpush1.bf16.msra.mxu0 0
  %289 = vmatprep.subr.bf16.mxu0 0
  %290 = vmatpush1.bf16.msra.mxu0 0
  %291 = vmatprep.subr.bf16.mxu0 0
  %292 = vmatpush1.bf16.msra.mxu0 0
  %293 = vmatprep.subr.bf16.mxu0 0
  %294 = vmatpush1.bf16.msra.mxu0 0
  %295 = vmatprep.subr.bf16.mxu0 0
  %296 = vmatpush1.bf16.msra.mxu0 0
  %297 = vmatprep.subr.bf16.mxu0 0
  %298 = vmatpush1.bf16.msra.mxu0 0
  %299 = vmatprep.subr.bf16.mxu0 0
  %300 = vmatpush1.bf16.msra.mxu0 0
  %301 = vmatprep.subr.bf16.mxu0 0
  %302 = vmatpush1.bf16.msra.mxu0 %v282
  %303 = vmatprep.subr.bf16.mxu0 0
  %304 = vmatpush2.bf16.msra.mxu0 0
  %305 = vmatprep.subr.bf16.mxu0 0
  %306 = vmatpush2.bf16.msra.mxu0 0
  %307 = vmatprep.subr.bf16.mxu0 0
  %308 = vmatpush2.bf16.msra.mxu0 0
  %309 = vmatprep.subr.bf16.mxu0 0
  %310 = vmatpush2.bf16.msra.mxu0 0
  %311 = vmatprep.subr.bf16.mxu0 0
  %312 = vmatpush2.bf16.msra.mxu0 0
  %313 = vmatprep.subr.bf16.mxu0 0
  %314 = vmatpush2.bf16.msra.mxu0 0
  %315 = vmatprep.subr.bf16.mxu0 0
  %316 = vmatpush2.bf16.msra.mxu0 0
  %317 = vmatprep.subr.bf16.mxu0 0
  %318 = vmatpush2.bf16.msra.mxu0 0
  %319 = vmatprep.mubr.bf16.mxu0 0
  %320 = vmatmul.mubr.bf16.gmra.mxu0 %v285
  %v321 = vpop.f32.mrf.mxu0
  %v322 = vadd.f32 0.0, %v321
  %v323 = vpop.f32.mrf.mxu0
  %v324 = vpop.f32.mrf.mxu0
  %v325 = vadd.f32 0.0, %v324
  %v326 = vpop.f32.mrf.mxu0
  %327 = vdwg.mxu0
  %328 = vrot.lane.b32.xlu0 %v202, 112
  %v329 = vpop.permute.xlu0 %328
  %330 = vrot.lane.b32.xlu0 %v202, 80
  %v331 = vpop.permute.xlu0 %330
  %v333 = vsel %vm206, %v329, 0
  %v336 = vsel %vm206, %v331, 0
  %338 = vmatprep.subr.bf16.mxu0 0
  %339 = vmatpush1.bf16.xpose.msra.mxu0 0
  %340 = vmatprep.subr.bf16.mxu0 0
  %341 = vmatpush1.bf16.xpose.msra.mxu0 0
  %342 = vmatprep.subr.bf16.mxu0 0
  %343 = vmatpush1.bf16.xpose.msra.mxu0 0
  %344 = vmatprep.subr.bf16.mxu0 0
  %345 = vmatpush1.bf16.xpose.msra.mxu0 0
  %346 = vmatprep.subr.bf16.mxu0 0
  %347 = vmatpush1.bf16.xpose.msra.mxu0 0
  %348 = vmatprep.subr.bf16.mxu0 0
  %349 = vmatpush1.bf16.xpose.msra.mxu0 0
  %350 = vmatprep.subr.bf16.mxu0 0
  %351 = vmatpush1.bf16.xpose.msra.mxu0 0
  %352 = vmatprep.subr.bf16.mxu0 0
  %353 = vmatpush1.bf16.xpose.msra.mxu0 %v336
  %354 = vmatprep.subr.bf16.mxu0 0
  %355 = vmatpush2.bf16.xpose.msra.mxu0 0
  %356 = vmatprep.subr.bf16.mxu0 0
  %357 = vmatpush2.bf16.xpose.msra.mxu0 0
  %358 = vmatprep.subr.bf16.mxu0 0
  %359 = vmatpush2.bf16.xpose.msra.mxu0 0
  %360 = vmatprep.subr.bf16.mxu0 0
  %361 = vmatpush2.bf16.xpose.msra.mxu0 0
  %362 = vmatprep.subr.bf16.mxu0 0
  %363 = vmatpush2.bf16.xpose.msra.mxu0 0
  %364 = vmatprep.subr.bf16.mxu0 0
  %365 = vmatpush2.bf16.xpose.msra.mxu0 0
  %366 = vmatprep.subr.bf16.mxu0 0
  %367 = vmatpush2.bf16.xpose.msra.mxu0 0
  %368 = vmatprep.subr.bf16.mxu0 0
  %369 = vmatpush2.bf16.xpose.msra.mxu0 0
  %370 = vmatprep.mubr.bf16.mxu0 0
  %371 = vmatmul.mubr.bf16.gmra.mxu0 %v333
  %v372 = vpop.f32.mrf.mxu0
  %v373 = vadd.f32 0.0, %v372
  %v374 = vpop.f32.mrf.mxu0
  %v375 = vpop.f32.mrf.mxu0
  %v376 = vadd.f32 0.0, %v375
  %v377 = vpop.f32.mrf.mxu0
  %378 = vdwg.mxu0
  %v379 = vmul.f32 %v373, 0.25
  %v380 = vmul.f32 %v376, 0.25
  %v381 = vsel %vm200, %v379, -1e+30
  %v382 = vsel %vm201, %v380, -1e+30
  %v383 = vsel %vm206, %v381, -inf
  %384 = vmax.xlane.f32.xlu0 %v383
  %v385 = vpop.xlane.xlu0 %384
  %v386 = vsel %vm206, %v382, -inf
  %387 = vmax.xlane.f32.xlu0 %v386
  %v388 = vpop.xlane.xlu0 %387
  %v389 = vsub.f32 %v381, %v385
  %v390 = vsub.f32 %v382, %v388
  %v391 = vmul.f32 %v389, 1.442695
  %v392 = vpow.pop %v391
  %v393 = vmul.f32 %v390, 1.442695
  %v394 = vpow.pop %v393
  %v395 = vsel %vm206, %v392, 0.0
  %396 = vadd.xlane.f32.xlu0 %v395
  %v397 = vpop.xlane.xlu0 %396
  %v398 = vsel %vm206, %v394, 0.0
  %399 = vadd.xlane.f32.xlu0 %v398
  %v400 = vpop.xlane.xlu0 %399
  %v401 = vrcp.pop %v397
  %v402 = vrcp.pop %v400
  %v403 = vmul.f32 %v392, %v401
  %v404 = vmul.f32 %v394, %v402
  %v405 = vpack.c.bf16 %v404, %v403
  %406 = vrot.lane.b32.xlu0 %v202, 48
  %v407 = vpop.permute.xlu0 %406
  %v410 = vsel %vm206, %v405, 0
  %412 = vmatprep.subr.bf16.mxu0 0
  %413 = vmatpush1.bf16.msra.mxu0 0
  %414 = vmatprep.subr.bf16.mxu0 0
  %415 = vmatpush1.bf16.msra.mxu0 0
  %416 = vmatprep.subr.bf16.mxu0 0
  %417 = vmatpush1.bf16.msra.mxu0 0
  %418 = vmatprep.subr.bf16.mxu0 0
  %419 = vmatpush1.bf16.msra.mxu0 0
  %420 = vmatprep.subr.bf16.mxu0 0
  %421 = vmatpush1.bf16.msra.mxu0 0
  %422 = vmatprep.subr.bf16.mxu0 0
  %423 = vmatpush1.bf16.msra.mxu0 0
  %424 = vmatprep.subr.bf16.mxu0 0
  %425 = vmatpush1.bf16.msra.mxu0 0
  %426 = vmatprep.subr.bf16.mxu0 0
  %427 = vmatpush1.bf16.msra.mxu0 %v407
  %428 = vmatprep.subr.bf16.mxu0 0
  %429 = vmatpush2.bf16.msra.mxu0 0
  %430 = vmatprep.subr.bf16.mxu0 0
  %431 = vmatpush2.bf16.msra.mxu0 0
  %432 = vmatprep.subr.bf16.mxu0 0
  %433 = vmatpush2.bf16.msra.mxu0 0
  %434 = vmatprep.subr.bf16.mxu0 0
  %435 = vmatpush2.bf16.msra.mxu0 0
  %436 = vmatprep.subr.bf16.mxu0 0
  %437 = vmatpush2.bf16.msra.mxu0 0
  %438 = vmatprep.subr.bf16.mxu0 0
  %439 = vmatpush2.bf16.msra.mxu0 0
  %440 = vmatprep.subr.bf16.mxu0 0
  %441 = vmatpush2.bf16.msra.mxu0 0
  %442 = vmatprep.subr.bf16.mxu0 0
  %443 = vmatpush2.bf16.msra.mxu0 0
  %444 = vmatprep.mubr.bf16.mxu0 0
  %445 = vmatmul.mubr.bf16.gmra.mxu0 %v410
  %v446 = vpop.f32.mrf.mxu0
  %v447 = vadd.f32 0.0, %v446
  %v448 = vpop.f32.mrf.mxu0
  %v449 = vpop.f32.mrf.mxu0
  %v450 = vadd.f32 0.0, %v449
  %v451 = vpop.f32.mrf.mxu0
  %452 = vdwg.mxu0
  %455 = vrot.lane.b32.xlu0 %v447, 16
  %v456 = vpop.permute.xlu0 %455
  %457 = vrot.lane.b32.xlu0 %v450, 16
  %v458 = vpop.permute.xlu0 %457
  %v461 = vsel %vm206, %v322, %v456
  %v462 = vsel %vm206, %v325, %v458
  %v463 = vpack.c.bf16 %v192, %v189
  %465 = vrot.lane.b32.xlu0 %v463, 96
  %v466 = vpop.permute.xlu0 %465
  %v468 = vsel %vm206, %v463, 0
  %v471 = vsel %vm206, %v466, 0
  %473 = vmatprep.subr.bf16.mxu0 0
  %474 = vmatpush1.bf16.xpose.msra.mxu0 0
  %475 = vmatprep.subr.bf16.mxu0 0
  %476 = vmatpush1.bf16.xpose.msra.mxu0 0
  %477 = vmatprep.subr.bf16.mxu0 0
  %478 = vmatpush1.bf16.xpose.msra.mxu0 0
  %479 = vmatprep.subr.bf16.mxu0 0
  %480 = vmatpush1.bf16.xpose.msra.mxu0 0
  %481 = vmatprep.subr.bf16.mxu0 0
  %482 = vmatpush1.bf16.xpose.msra.mxu0 0
  %483 = vmatprep.subr.bf16.mxu0 0
  %484 = vmatpush1.bf16.xpose.msra.mxu0 0
  %485 = vmatprep.subr.bf16.mxu0 0
  %486 = vmatpush1.bf16.xpose.msra.mxu0 0
  %487 = vmatprep.subr.bf16.mxu0 0
  %488 = vmatpush1.bf16.xpose.msra.mxu0 %v471
  %489 = vmatprep.subr.bf16.mxu0 0
  %490 = vmatpush2.bf16.xpose.msra.mxu0 0
  %491 = vmatprep.subr.bf16.mxu0 0
  %492 = vmatpush2.bf16.xpose.msra.mxu0 0
  %493 = vmatprep.subr.bf16.mxu0 0
  %494 = vmatpush2.bf16.xpose.msra.mxu0 0
  %495 = vmatprep.subr.bf16.mxu0 0
  %496 = vmatpush2.bf16.xpose.msra.mxu0 0
  %497 = vmatprep.subr.bf16.mxu0 0
  %498 = vmatpush2.bf16.xpose.msra.mxu0 0
  %499 = vmatprep.subr.bf16.mxu0 0
  %500 = vmatpush2.bf16.xpose.msra.mxu0 0
  %501 = vmatprep.subr.bf16.mxu0 0
  %502 = vmatpush2.bf16.xpose.msra.mxu0 0
  %503 = vmatprep.subr.bf16.mxu0 0
  %504 = vmatpush2.bf16.xpose.msra.mxu0 0
  %505 = vmatprep.mubr.bf16.mxu0 0
  %506 = vmatmul.mubr.bf16.gmra.mxu0 %v468
  %v507 = vpop.f32.mrf.mxu0
  %v508 = vadd.f32 0.0, %v507
  %v509 = vpop.f32.mrf.mxu0
  %v510 = vpop.f32.mrf.mxu0
  %v511 = vadd.f32 0.0, %v510
  %v512 = vpop.f32.mrf.mxu0
  %513 = vdwg.mxu0
  %v514 = vmul.f32 %v508, 0.25
  %v515 = vmul.f32 %v511, 0.25
  %v516 = vsel %vm200, %v514, -1e+30
  %v517 = vsel %vm201, %v515, -1e+30
  %v518 = vsel %vm206, %v516, -inf
  %519 = vmax.xlane.f32.xlu0 %v518
  %v520 = vpop.xlane.xlu0 %519
  %v521 = vsel %vm206, %v517, -inf
  %522 = vmax.xlane.f32.xlu0 %v521
  %v523 = vpop.xlane.xlu0 %522
  %v524 = vsub.f32 %v516, %v520
  %v525 = vsub.f32 %v517, %v523
  %v526 = vmul.f32 %v524, 1.442695
  %v527 = vpow.pop %v526
  %v528 = vmul.f32 %v525, 1.442695
  %v529 = vpow.pop %v528
  %v530 = vsel %vm206, %v527, 0.0
  %531 = vadd.xlane.f32.xlu0 %v530
  %v532 = vpop.xlane.xlu0 %531
  %v533 = vsel %vm206, %v529, 0.0
  %534 = vadd.xlane.f32.xlu0 %v533
  %v535 = vpop.xlane.xlu0 %534
  %v536 = vrcp.pop %v532
  %v537 = vrcp.pop %v535
  %v538 = vmul.f32 %v527, %v536
  %v539 = vmul.f32 %v529, %v537
  %v540 = vpack.c.bf16 %v539, %v538
  %541 = vrot.lane.b32.xlu0 %v463, 64
  %v542 = vpop.permute.xlu0 %541
  %v545 = vsel %vm206, %v540, 0
  %547 = vmatprep.subr.bf16.mxu0 0
  %548 = vmatpush1.bf16.msra.mxu0 0
  %549 = vmatprep.subr.bf16.mxu0 0
  %550 = vmatpush1.bf16.msra.mxu0 0
  %551 = vmatprep.subr.bf16.mxu0 0
  %552 = vmatpush1.bf16.msra.mxu0 0
  %553 = vmatprep.subr.bf16.mxu0 0
  %554 = vmatpush1.bf16.msra.mxu0 0
  %555 = vmatprep.subr.bf16.mxu0 0
  %556 = vmatpush1.bf16.msra.mxu0 0
  %557 = vmatprep.subr.bf16.mxu0 0
  %558 = vmatpush1.bf16.msra.mxu0 0
  %559 = vmatprep.subr.bf16.mxu0 0
  %560 = vmatpush1.bf16.msra.mxu0 0
  %561 = vmatprep.subr.bf16.mxu0 0
  %562 = vmatpush1.bf16.msra.mxu0 %v542
  %563 = vmatprep.subr.bf16.mxu0 0
  %564 = vmatpush2.bf16.msra.mxu0 0
  %565 = vmatprep.subr.bf16.mxu0 0
  %566 = vmatpush2.bf16.msra.mxu0 0
  %567 = vmatprep.subr.bf16.mxu0 0
  %568 = vmatpush2.bf16.msra.mxu0 0
  %569 = vmatprep.subr.bf16.mxu0 0
  %570 = vmatpush2.bf16.msra.mxu0 0
  %571 = vmatprep.subr.bf16.mxu0 0
  %572 = vmatpush2.bf16.msra.mxu0 0
  %573 = vmatprep.subr.bf16.mxu0 0
  %574 = vmatpush2.bf16.msra.mxu0 0
  %575 = vmatprep.subr.bf16.mxu0 0
  %576 = vmatpush2.bf16.msra.mxu0 0
  %577 = vmatprep.subr.bf16.mxu0 0
  %578 = vmatpush2.bf16.msra.mxu0 0
  %579 = vmatprep.mubr.bf16.mxu0 0
  %580 = vmatmul.mubr.bf16.gmra.mxu0 %v545
  %v581 = vpop.f32.mrf.mxu0
  %v582 = vadd.f32 0.0, %v581
  %v583 = vpop.f32.mrf.mxu0
  %v584 = vpop.f32.mrf.mxu0
  %v585 = vadd.f32 0.0, %v584
  %v586 = vpop.f32.mrf.mxu0
  %587 = vdwg.mxu0
  %588 = vrot.lane.b32.xlu0 %v463, 112
  %v589 = vpop.permute.xlu0 %588
  %590 = vrot.lane.b32.xlu0 %v463, 80
  %v591 = vpop.permute.xlu0 %590
  %v593 = vsel %vm206, %v589, 0
  %v596 = vsel %vm206, %v591, 0
  %598 = vmatprep.subr.bf16.mxu0 0
  %599 = vmatpush1.bf16.xpose.msra.mxu0 0
  %600 = vmatprep.subr.bf16.mxu0 0
  %601 = vmatpush1.bf16.xpose.msra.mxu0 0
  %602 = vmatprep.subr.bf16.mxu0 0
  %603 = vmatpush1.bf16.xpose.msra.mxu0 0
  %604 = vmatprep.subr.bf16.mxu0 0
  %605 = vmatpush1.bf16.xpose.msra.mxu0 0
  %606 = vmatprep.subr.bf16.mxu0 0
  %607 = vmatpush1.bf16.xpose.msra.mxu0 0
  %608 = vmatprep.subr.bf16.mxu0 0
  %609 = vmatpush1.bf16.xpose.msra.mxu0 0
  %610 = vmatprep.subr.bf16.mxu0 0
  %611 = vmatpush1.bf16.xpose.msra.mxu0 0
  %612 = vmatprep.subr.bf16.mxu0 0
  %613 = vmatpush1.bf16.xpose.msra.mxu0 %v596
  %614 = vmatprep.subr.bf16.mxu0 0
  %615 = vmatpush2.bf16.xpose.msra.mxu0 0
  %616 = vmatprep.subr.bf16.mxu0 0
  %617 = vmatpush2.bf16.xpose.msra.mxu0 0
  %618 = vmatprep.subr.bf16.mxu0 0
  %619 = vmatpush2.bf16.xpose.msra.mxu0 0
  %620 = vmatprep.subr.bf16.mxu0 0
  %621 = vmatpush2.bf16.xpose.msra.mxu0 0
  %622 = vmatprep.subr.bf16.mxu0 0
  %623 = vmatpush2.bf16.xpose.msra.mxu0 0
  %624 = vmatprep.subr.bf16.mxu0 0
  %625 = vmatpush2.bf16.xpose.msra.mxu0 0
  %626 = vmatprep.subr.bf16.mxu0 0
  %627 = vmatpush2.bf16.xpose.msra.mxu0 0
  %628 = vmatprep.subr.bf16.mxu0 0
  %629 = vmatpush2.bf16.xpose.msra.mxu0 0
  %630 = vmatprep.mubr.bf16.mxu0 0
  %631 = vmatmul.mubr.bf16.gmra.mxu0 %v593
  %v632 = vpop.f32.mrf.mxu0
  %v633 = vadd.f32 0.0, %v632
  %v634 = vpop.f32.mrf.mxu0
  %v635 = vpop.f32.mrf.mxu0
  %v636 = vadd.f32 0.0, %v635
  %v637 = vpop.f32.mrf.mxu0
  %638 = vdwg.mxu0
  %v639 = vmul.f32 %v633, 0.25
  %v640 = vmul.f32 %v636, 0.25
  %v641 = vsel %vm200, %v639, -1e+30
  %v642 = vsel %vm201, %v640, -1e+30
  %v643 = vsel %vm206, %v641, -inf
  %644 = vmax.xlane.f32.xlu0 %v643
  %v645 = vpop.xlane.xlu0 %644
  %v646 = vsel %vm206, %v642, -inf
  %647 = vmax.xlane.f32.xlu0 %v646
  %v648 = vpop.xlane.xlu0 %647
  %v649 = vsub.f32 %v641, %v645
  %v650 = vsub.f32 %v642, %v648
  %v651 = vmul.f32 %v649, 1.442695
  %v652 = vpow.pop %v651
  %v653 = vmul.f32 %v650, 1.442695
  %v654 = vpow.pop %v653
  %v655 = vsel %vm206, %v652, 0.0
  %656 = vadd.xlane.f32.xlu0 %v655
  %v657 = vpop.xlane.xlu0 %656
  %v658 = vsel %vm206, %v654, 0.0
  %659 = vadd.xlane.f32.xlu0 %v658
  %v660 = vpop.xlane.xlu0 %659
  %v661 = vrcp.pop %v657
  %v662 = vrcp.pop %v660
  %v663 = vmul.f32 %v652, %v661
  %v664 = vmul.f32 %v654, %v662
  %v665 = vpack.c.bf16 %v664, %v663
  %666 = vrot.lane.b32.xlu0 %v463, 48
  %v667 = vpop.permute.xlu0 %666
  %v670 = vsel %vm206, %v665, 0
  %672 = vmatprep.subr.bf16.mxu0 0
  %673 = vmatpush1.bf16.msra.mxu0 0
  %674 = vmatprep.subr.bf16.mxu0 0
  %675 = vmatpush1.bf16.msra.mxu0 0
  %676 = vmatprep.subr.bf16.mxu0 0
  %677 = vmatpush1.bf16.msra.mxu0 0
  %678 = vmatprep.subr.bf16.mxu0 0
  %679 = vmatpush1.bf16.msra.mxu0 0
  %680 = vmatprep.subr.bf16.mxu0 0
  %681 = vmatpush1.bf16.msra.mxu0 0
  %682 = vmatprep.subr.bf16.mxu0 0
  %683 = vmatpush1.bf16.msra.mxu0 0
  %684 = vmatprep.subr.bf16.mxu0 0
  %685 = vmatpush1.bf16.msra.mxu0 0
  %686 = vmatprep.subr.bf16.mxu0 0
  %687 = vmatpush1.bf16.msra.mxu0 %v667
  %688 = vmatprep.subr.bf16.mxu0 0
  %689 = vmatpush2.bf16.msra.mxu0 0
  %690 = vmatprep.subr.bf16.mxu0 0
  %691 = vmatpush2.bf16.msra.mxu0 0
  %692 = vmatprep.subr.bf16.mxu0 0
  %693 = vmatpush2.bf16.msra.mxu0 0
  %694 = vmatprep.subr.bf16.mxu0 0
  %695 = vmatpush2.bf16.msra.mxu0 0
  %696 = vmatprep.subr.bf16.mxu0 0
  %697 = vmatpush2.bf16.msra.mxu0 0
  %698 = vmatprep.subr.bf16.mxu0 0
  %699 = vmatpush2.bf16.msra.mxu0 0
  %700 = vmatprep.subr.bf16.mxu0 0
  %701 = vmatpush2.bf16.msra.mxu0 0
  %702 = vmatprep.subr.bf16.mxu0 0
  %703 = vmatpush2.bf16.msra.mxu0 0
  %704 = vmatprep.mubr.bf16.mxu0 0
  %705 = vmatmul.mubr.bf16.gmra.mxu0 %v670
  %v706 = vpop.f32.mrf.mxu0
  %v707 = vadd.f32 0.0, %v706
  %v708 = vpop.f32.mrf.mxu0
  %v709 = vpop.f32.mrf.mxu0
  %v710 = vadd.f32 0.0, %v709
  %v711 = vpop.f32.mrf.mxu0
  %712 = vdwg.mxu0
  %715 = vrot.lane.b32.xlu0 %v707, 16
  %v716 = vpop.permute.xlu0 %715
  %717 = vrot.lane.b32.xlu0 %v710, 16
  %v718 = vpop.permute.xlu0 %717
  %v721 = vsel %vm206, %v582, %v716
  %v722 = vsel %vm206, %v585, %v718
  %v723 = vld [vmem:[%s5] sm:$0xff]
  %v724 = vld [vmem:[%s5 + $0x8] sm:$0xff]
  %v725 = vld [vmem:[%s5 + $0x10] sm:$0xff]
  %v726 = vld [vmem:[%s5 + $0x18] sm:$0xff]
  %v727 = vpack.c.bf16 %v462, %v461
  %v728 = vpack.c.bf16 %v722, %v721
  %v729 = vpack.c.bf16 %v724, %v723
  %v730 = vpack.c.bf16 %v726, %v725
  %v732 = vsel %vm51, %v727, 0
  %v735 = vsel %vm51, %v728, 0
  %737 = vmatprep.subr.bf16.mxu0 0
  %738 = vmatpush1.bf16.msra.mxu0 0
  %739 = vmatprep.subr.bf16.mxu0 0
  %740 = vmatpush1.bf16.msra.mxu0 0
  %741 = vmatprep.subr.bf16.mxu0 0
  %742 = vmatpush1.bf16.msra.mxu0 0
  %743 = vmatprep.subr.bf16.mxu0 0
  %744 = vmatpush1.bf16.msra.mxu0 0
  %745 = vmatprep.subr.bf16.mxu0 0
  %746 = vmatpush1.bf16.msra.mxu0 0
  %747 = vmatprep.subr.bf16.mxu0 0
  %748 = vmatpush1.bf16.msra.mxu0 0
  %749 = vmatprep.subr.bf16.mxu0 0
  %750 = vmatpush1.bf16.msra.mxu0 %v730
  %751 = vmatprep.subr.bf16.mxu0 0
  %752 = vmatpush1.bf16.msra.mxu0 %v729
  %753 = vmatprep.subr.bf16.mxu0 0
  %754 = vmatpush2.bf16.msra.mxu0 0
  %755 = vmatprep.subr.bf16.mxu0 0
  %756 = vmatpush2.bf16.msra.mxu0 0
  %757 = vmatprep.subr.bf16.mxu0 0
  %758 = vmatpush2.bf16.msra.mxu0 0
  %759 = vmatprep.subr.bf16.mxu0 0
  %760 = vmatpush2.bf16.msra.mxu0 0
  %761 = vmatprep.subr.bf16.mxu0 0
  %762 = vmatpush2.bf16.msra.mxu0 0
  %763 = vmatprep.subr.bf16.mxu0 0
  %764 = vmatpush2.bf16.msra.mxu0 0
  %765 = vmatprep.subr.bf16.mxu0 0
  %766 = vmatpush2.bf16.msra.mxu0 0
  %767 = vmatprep.subr.bf16.mxu0 0
  %768 = vmatpush2.bf16.msra.mxu0 0
  %769 = vmatprep.mubr.bf16.mxu0 0
  %770 = vmatmul.mubr.bf16.gmra.mxu0 %v732
  %v771 = vpop.f32.mrf.mxu0
  %v772 = vadd.f32 0.0, %v771
  %v773 = vpop.f32.mrf.mxu0
  %v774 = vpop.f32.mrf.mxu0
  %v775 = vadd.f32 0.0, %v774
  %v776 = vpop.f32.mrf.mxu0
  %777 = vmatprep.mubr.bf16.mxu0 0
  %778 = vmatmul.mubr.bf16.gmra.mxu0 %v735
  %v779 = vpop.f32.mrf.mxu0
  %v780 = vadd.f32 0.0, %v779
  %v781 = vpop.f32.mrf.mxu0
  %v782 = vpop.f32.mrf.mxu0
  %v783 = vadd.f32 0.0, %v782
  %v784 = vpop.f32.mrf.mxu0
  %785 = vdwg.mxu0
  %v786 = vadd.f32 %v45, %v772
  %v787 = vadd.f32 %v46, %v775
  %v788 = vadd.f32 %v47, %v780
  %v789 = vadd.f32 %v48, %v783
  %v790 = vld [vmem:[%s6] sm:$0x1]
  %v792 = vlaneseq
  %v793 = vshrl.u32 %v792, 7
  %v794 = vsub.s32 0, %v793
  %v795 = vrot.slane %v790, %v794
  %v797 = vadd.f32 %v786, %v795
  %v798 = vadd.f32 %v787, %v795
  %v799 = vadd.f32 %v788, %v795
  %v800 = vadd.f32 %v789, %v795
  %v801 = vld [vmem:[%s7] sm:$0x1]
  %v802 = vld [vmem:[%s8] sm:$0x1]
  %v803 = vsel %vm51, %v797, 0.0
  %804 = vadd.xlane.f32.xlu0 %v803
  %v805 = vpop.xlane.xlu0 %804
  %v806 = vsel %vm51, %v798, 0.0
  %807 = vadd.xlane.f32.xlu0 %v806
  %v808 = vpop.xlane.xlu0 %807
  %v809 = vsel %vm51, %v799, 0.0
  %810 = vadd.xlane.f32.xlu0 %v809
  %v811 = vpop.xlane.xlu0 %810
  %v812 = vsel %vm51, %v800, 0.0
  %813 = vadd.xlane.f32.xlu0 %v812
  %v814 = vpop.xlane.xlu0 %813
  %v815 = vmul.f32 %v805, %v64
  %v816 = vmul.f32 %v808, %v64
  %v817 = vmul.f32 %v811, %v64
  %v818 = vmul.f32 %v814, %v64
  %v819 = vsub.f32 %v797, %v815
  %v820 = vsub.f32 %v798, %v816
  %v821 = vsub.f32 %v799, %v817
  %v822 = vsub.f32 %v800, %v818
  %v823 = vmul.f32 %v819, %v819
  %v824 = vmul.f32 %v820, %v820
  %v825 = vmul.f32 %v821, %v821
  %v826 = vmul.f32 %v822, %v822
  %v827 = vsel %vm51, %v823, 0.0
  %828 = vadd.xlane.f32.xlu0 %v827
  %v829 = vpop.xlane.xlu0 %828
  %v830 = vsel %vm51, %v824, 0.0
  %831 = vadd.xlane.f32.xlu0 %v830
  %v832 = vpop.xlane.xlu0 %831
  %v833 = vsel %vm51, %v825, 0.0
  %834 = vadd.xlane.f32.xlu0 %v833
  %v835 = vpop.xlane.xlu0 %834
  %v836 = vsel %vm51, %v826, 0.0
  %837 = vadd.xlane.f32.xlu0 %v836
  %v838 = vpop.xlane.xlu0 %837
  %v839 = vmul.f32 %v829, %v64
  %v840 = vmul.f32 %v832, %v64
  %v841 = vmul.f32 %v835, %v64
  %v842 = vmul.f32 %v838, %v64
  %v843 = vadd.f32 %v839, 1e-05
  %v844 = vadd.f32 %v840, 1e-05
  %v845 = vadd.f32 %v841, 1e-05
  %v846 = vadd.f32 %v842, 1e-05
  %v847 = vrsqrt.pop %v843
  %v848 = vrsqrt.pop %v844
  %v849 = vrsqrt.pop %v845
  %v850 = vrsqrt.pop %v846
  %v851 = vmul.f32 %v819, %v847
  %v852 = vmul.f32 %v820, %v848
  %v853 = vmul.f32 %v821, %v849
  %v854 = vmul.f32 %v822, %v850
  %v856 = vlaneseq
  %v857 = vshrl.u32 %v856, 7
  %v858 = vsub.s32 0, %v857
  %v859 = vrot.slane %v801, %v858
  %v861 = vmul.f32 %v851, %v859
  %v862 = vmul.f32 %v852, %v859
  %v863 = vmul.f32 %v853, %v859
  %v864 = vmul.f32 %v854, %v859
  %v866 = vlaneseq
  %v867 = vshrl.u32 %v866, 7
  %v868 = vsub.s32 0, %v867
  %v869 = vrot.slane %v802, %v868
  %v871 = vadd.f32 %v861, %v869
  %v872 = vadd.f32 %v862, %v869
  %v873 = vadd.f32 %v863, %v869
  %v874 = vadd.f32 %v864, %v869
  %v875 = vld [vmem:[%s9] sm:$0xff]
  %v876 = vld [vmem:[%s9 + $0x8] sm:$0xff]
  %v877 = vld [vmem:[%s9 + $0x10] sm:$0xff]
  %v878 = vld [vmem:[%s9 + $0x18] sm:$0xff]
  %v879 = vpack.c.bf16 %v872, %v871
  %v880 = vpack.c.bf16 %v874, %v873
  %v881 = vpack.c.bf16 %v876, %v875
  %v882 = vpack.c.bf16 %v878, %v877
  %v883 = vld [vmem:[%s10] sm:$0x1]
  %v885 = vlaneseq
  %v886 = vshrl.u32 %v885, 7
  %v887 = vsub.s32 0, %v886
  %v888 = vrot.slane %v883, %v887
  %v891 = vsel %vm51, %v879, 0
  %v894 = vsel %vm51, %v880, 0
  %896 = vmatprep.subr.bf16.mxu0 0
  %897 = vmatpush1.bf16.msra.mxu0 0
  %898 = vmatprep.subr.bf16.mxu0 0
  %899 = vmatpush1.bf16.msra.mxu0 0
  %900 = vmatprep.subr.bf16.mxu0 0
  %901 = vmatpush1.bf16.msra.mxu0 0
  %902 = vmatprep.subr.bf16.mxu0 0
  %903 = vmatpush1.bf16.msra.mxu0 0
  %904 = vmatprep.subr.bf16.mxu0 0
  %905 = vmatpush1.bf16.msra.mxu0 0
  %906 = vmatprep.subr.bf16.mxu0 0
  %907 = vmatpush1.bf16.msra.mxu0 0
  %908 = vmatprep.subr.bf16.mxu0 0
  %909 = vmatpush1.bf16.msra.mxu0 %v882
  %910 = vmatprep.subr.bf16.mxu0 0
  %911 = vmatpush1.bf16.msra.mxu0 %v881
  %912 = vmatprep.subr.bf16.mxu0 0
  %913 = vmatpush2.bf16.msra.mxu0 0
  %914 = vmatprep.subr.bf16.mxu0 0
  %915 = vmatpush2.bf16.msra.mxu0 0
  %916 = vmatprep.subr.bf16.mxu0 0
  %917 = vmatpush2.bf16.msra.mxu0 0
  %918 = vmatprep.subr.bf16.mxu0 0
  %919 = vmatpush2.bf16.msra.mxu0 0
  %920 = vmatprep.subr.bf16.mxu0 0
  %921 = vmatpush2.bf16.msra.mxu0 0
  %922 = vmatprep.subr.bf16.mxu0 0
  %923 = vmatpush2.bf16.msra.mxu0 0
  %924 = vmatprep.subr.bf16.mxu0 0
  %925 = vmatpush2.bf16.msra.mxu0 0
  %926 = vmatprep.subr.bf16.mxu0 0
  %927 = vmatpush2.bf16.msra.mxu0 0
  %928 = vmatprep.mubr.bf16.mxu0 0
  %929 = vmatmul.mubr.bf16.gmra.mxu0 %v891
  %v930 = vpop.f32.mrf.mxu0
  %v931 = vadd.f32 %v888, %v930
  %v932 = vpop.f32.mrf.mxu0
  %v933 = vpop.f32.mrf.mxu0
  %v934 = vadd.f32 %v888, %v933
  %v935 = vpop.f32.mrf.mxu0
  %936 = vmatprep.mubr.bf16.mxu0 0
  %937 = vmatmul.mubr.bf16.gmra.mxu0 %v894
  %v938 = vpop.f32.mrf.mxu0
  %v939 = vadd.f32 %v888, %v938
  %v940 = vpop.f32.mrf.mxu0
  %v941 = vpop.f32.mrf.mxu0
  %v942 = vadd.f32 %v888, %v941
  %v943 = vpop.f32.mrf.mxu0
  %944 = vdwg.mxu0
  %v945 = vmul.f32 %v931, 0.5
  %v946 = vmul.f32 %v934, 0.5
  %v947 = vmul.f32 %v939, 0.5
  %v948 = vmul.f32 %v942, 0.5
  %v949 = vmul.f32 %v931, 0.044715
  %v950 = vmul.f32 %v934, 0.044715
  %v951 = vmul.f32 %v939, 0.044715
  %v952 = vmul.f32 %v942, 0.044715
  %v953 = vmul.f32 %v949, %v931
  %v954 = vmul.f32 %v950, %v934
  %v955 = vmul.f32 %v951, %v939
  %v956 = vmul.f32 %v952, %v942
  %v957 = vmul.f32 %v953, %v931
  %v958 = vmul.f32 %v954, %v934
  %v959 = vmul.f32 %v955, %v939
  %v960 = vmul.f32 %v956, %v942
  %v961 = vadd.f32 %v931, %v957
  %v962 = vadd.f32 %v934, %v958
  %v963 = vadd.f32 %v939, %v959
  %v964 = vadd.f32 %v942, %v960
  %v965 = vmul.f32 %v961, 0.7978846
  %v966 = vmul.f32 %v962, 0.7978846
  %v967 = vmul.f32 %v963, 0.7978846
  %v968 = vmul.f32 %v964, 0.7978846
  %v969 = vtanh.pop %v965
  %v970 = vtanh.pop %v966
  %v971 = vtanh.pop %v967
  %v972 = vtanh.pop %v968
  %v973 = vadd.f32 %v969, 1.0
  %v974 = vadd.f32 %v970, 1.0
  %v975 = vadd.f32 %v971, 1.0
  %v976 = vadd.f32 %v972, 1.0
  %v977 = vmul.f32 %v945, %v973
  %v978 = vmul.f32 %v946, %v974
  %v979 = vmul.f32 %v947, %v975
  %v980 = vmul.f32 %v948, %v976
  %v981 = vld [vmem:[%s11] sm:$0xff]
  %v982 = vld [vmem:[%s11 + $0x8] sm:$0xff]
  %v983 = vld [vmem:[%s11 + $0x10] sm:$0xff]
  %v984 = vld [vmem:[%s11 + $0x18] sm:$0xff]
  %v985 = vld [vmem:[%s11 + $0x20] sm:$0xff]
  %v986 = vld [vmem:[%s11 + $0x28] sm:$0xff]
  %v987 = vld [vmem:[%s11 + $0x30] sm:$0xff]
  %v988 = vld [vmem:[%s11 + $0x38] sm:$0xff]
  %v989 = vld [vmem:[%s11 + $0x40] sm:$0xff]
  %v990 = vld [vmem:[%s11 + $0x48] sm:$0xff]
  %v991 = vld [vmem:[%s11 + $0x50] sm:$0xff]
  %v992 = vld [vmem:[%s11 + $0x58] sm:$0xff]
  %v993 = vld [vmem:[%s11 + $0x60] sm:$0xff]
  %v994 = vld [vmem:[%s11 + $0x68] sm:$0xff]
  %v995 = vld [vmem:[%s11 + $0x70] sm:$0xff]
  %v996 = vld [vmem:[%s11 + $0x78] sm:$0xff]
  %v997 = vpack.c.bf16 %v978, %v977
  %v998 = vpack.c.bf16 %v980, %v979
  %v999 = vpack.c.bf16 %v982, %v981
  %v1000 = vpack.c.bf16 %v984, %v983
  %v1001 = vpack.c.bf16 %v986, %v985
  %v1002 = vpack.c.bf16 %v988, %v987
  %v1003 = vpack.c.bf16 %v990, %v989
  %v1004 = vpack.c.bf16 %v992, %v991
  %v1005 = vpack.c.bf16 %v994, %v993
  %v1006 = vpack.c.bf16 %v996, %v995
  %1007 = vmatprep.subr.bf16.mxu0 0
  %1008 = vmatpush1.bf16.msra.mxu0 %v1006
  %1009 = vmatprep.subr.bf16.mxu0 0
  %1010 = vmatpush1.bf16.msra.mxu0 %v1005
  %1011 = vmatprep.subr.bf16.mxu0 0
  %1012 = vmatpush1.bf16.msra.mxu0 %v1004
  %1013 = vmatprep.subr.bf16.mxu0 0
  %1014 = vmatpush1.bf16.msra.mxu0 %v1003
  %1015 = vmatprep.subr.bf16.mxu0 0
  %1016 = vmatpush1.bf16.msra.mxu0 %v1002
  %1017 = vmatprep.subr.bf16.mxu0 0
  %1018 = vmatpush1.bf16.msra.mxu0 %v1001
  %1019 = vmatprep.subr.bf16.mxu0 0
  %1020 = vmatpush1.bf16.msra.mxu0 %v1000
  %1021 = vmatprep.subr.bf16.mxu0 0
  %1022 = vmatpush1.bf16.msra.mxu0 %v999
  %1023 = vmatprep.subr.bf16.mxu0 0
  %1024 = vmatpush2.bf16.msra.mxu0 0
  %1025 = vmatprep.subr.bf16.mxu0 0
  %1026 = vmatpush2.bf16.msra.mxu0 0
  %1027 = vmatprep.subr.bf16.mxu0 0
  %1028 = vmatpush2.bf16.msra.mxu0 0
  %1029 = vmatprep.subr.bf16.mxu0 0
  %1030 = vmatpush2.bf16.msra.mxu0 0
  %1031 = vmatprep.subr.bf16.mxu0 0
  %1032 = vmatpush2.bf16.msra.mxu0 0
  %1033 = vmatprep.subr.bf16.mxu0 0
  %1034 = vmatpush2.bf16.msra.mxu0 0
  %1035 = vmatprep.subr.bf16.mxu0 0
  %1036 = vmatpush2.bf16.msra.mxu0 0
  %1037 = vmatprep.subr.bf16.mxu0 0
  %1038 = vmatpush2.bf16.msra.mxu0 0
  %1039 = vmatprep.mubr.bf16.mxu0 0
  %1040 = vmatmul.mubr.bf16.gmra.mxu0 %v997
  %v1041 = vpop.f32.mrf.mxu0
  %v1042 = vadd.f32 0.0, %v1041
  %v1043 = vpop.f32.mrf.mxu0
  %v1044 = vpop.f32.mrf.mxu0
  %v1045 = vadd.f32 0.0, %v1044
  %v1046 = vpop.f32.mrf.mxu0
  %1047 = vmatprep.mubr.bf16.mxu0 0
  %1048 = vmatmul.mubr.bf16.gmra.mxu0 %v998
  %v1049 = vpop.f32.mrf.mxu0
  %v1050 = vadd.f32 0.0, %v1049
  %v1051 = vpop.f32.mrf.mxu0
  %v1052 = vpop.f32.mrf.mxu0
  %v1053 = vadd.f32 0.0, %v1052
  %v1054 = vpop.f32.mrf.mxu0
  %1055 = vdwg.mxu0
  %v1056 = vadd.f32 %v797, %v1042
  %v1057 = vadd.f32 %v798, %v1045
  %v1058 = vadd.f32 %v799, %v1050
  %v1059 = vadd.f32 %v800, %v1053
  %v1060 = vld [vmem:[%s12] sm:$0x1]
  %v1062 = vlaneseq
  %v1063 = vshrl.u32 %v1062, 7
  %v1064 = vsub.s32 0, %v1063
  %v1065 = vrot.slane %v1060, %v1064
  %v1067 = vadd.f32 %v1056, %v1065
  %v1068 = vadd.f32 %v1057, %v1065
  %v1069 = vadd.f32 %v1058, %v1065
  %v1070 = vadd.f32 %v1059, %v1065
  %1071 = vst.msk [vmem:[%s13] sm:$0xff] %vm51, %v1067
  %1072 = vst.msk [vmem:[%s13 + $0x8] sm:$0xff] %vm51, %v1068
  %1073 = vst.msk [vmem:[%s13 + $0x10] sm:$0xff] %vm51, %v1069
  %1074 = vst.msk [vmem:[%s13 + $0x18] sm:$0xff] %vm51, %v1070
  // Predicated region
  $region54: #{gpt_forward.3} parent=0 // pred_check
    _
  $region55: #{gpt_forward.3} parent=0 // pred_check_branch
    %1076 = sbr.rel (0) target = $region57
  $region56: #{gpt_forward.3} parent=0 // pred_region
    _
  $region57: #{gpt_forward.3} parent=0 // pred_fallthru
    _
  // Predicated region
  $region58: #{gpt_forward.3} parent=0 // pred_check
    _
  $region59: #{gpt_forward.3} parent=0 // pred_check_branch
    %1078 = sbr.rel (0) target = $region61
  $region60: #{gpt_forward.3} parent=0 // pred_region
    _
  $region61: #{gpt_forward.3} parent=0 // pred_fallthru
    _

</llo_original>
